<compile_context>
chip_gen: v7x
topology: tpu7x:2x2x1
jax: 0.10.0
libtpu: 0.0.40
codegen_flags: <defaults>
</compile_context>

<pallas_src>
import math
import functools

import jax
import jax.numpy as jnp
from jax import lax
from jax.experimental import pallas as pl
from jax.experimental.pallas import tpu as pltpu


def _layer_norm(v, gamma, beta, eps=1e-5):
    # PyTorch LayerNorm: biased variance over last dim, f32 math.
    mu = jnp.mean(v, axis=-1, keepdims=True)
    var = jnp.mean((v - mu) ** 2, axis=-1, keepdims=True)
    return (v - mu) * lax.rsqrt(var + eps) * gamma + beta


def fused_encoder_kernel(
    x_ref,      # [Bt, S, D]   f32
    wqkv_ref,   # [D, 3*D]     bf16   (Wq*scale | Wk | Wv), layer-squeezed
    bqkv_ref,   # [1, 3*D]     f32    (bq*scale | bk | bv)
    wo_ref,     # [D, D]       bf16
    w1_ref,     # [D, DFF]     bf16
    bf1_ref,    # [1, DFF]     f32
    w2_ref,     # [DFF, D]     bf16
    vecs_ref,   # [6, D]       f32    rows: bo, g1, be1, bf2, g2, be2
    o_ref,      # [Bt, S, D]   f32    output block == layer carry (resident in VMEM)
    *, num_heads: int,
):
    f32 = jnp.float32
    bf16 = jnp.bfloat16
    l = pl.program_id(1)

    # Initialize the resident carry from the input on the first layer.
    @pl.when(l == 0)
    def _():
        o_ref[...] = x_ref[...].astype(o_ref.dtype)

    x = o_ref[...].astype(f32)                     # [Bt, S, D]
    Bt, S, D = x.shape
    H = num_heads
    hd = D // H
    M = Bt * S

    x2 = x.reshape(M, D)                           # token-major view for projections

    # ---------- QKV projection: one full-width matmul ----------
    qkv = jnp.dot(x2.astype(bf16), wqkv_ref[...],
                  preferred_element_type=f32) + bqkv_ref[...]       # [M, 3D]
    qkv3 = qkv.reshape(Bt, S, 3 * D)

    # ---------- per-head attention (static head loop, batched over Bt) ----------
    ctx_heads = []
    for h in range(H):
        q_h = qkv3[:, :, h * hd:(h + 1) * hd]                       # scale already folded in
        k_h = qkv3[:, :, D + h * hd: D + (h + 1) * hd]
        v_h = qkv3[:, :, 2 * D + h * hd: 2 * D + (h + 1) * hd]

        s = lax.dot_general(                                        # [Bt, S, S]
            q_h.astype(bf16), k_h.astype(bf16),
            dimension_numbers=(((2,), (2,)), ((0,), (0,))),
            preferred_element_type=f32)
        s = s - jnp.max(s, axis=-1, keepdims=True)
        p = jnp.exp(s)
        inv_denom = pl.reciprocal(jnp.sum(p, axis=-1, keepdims=True), approx=True)

        o_h = lax.dot_general(                                      # [Bt, S, hd]
            p.astype(bf16), v_h.astype(bf16),
            dimension_numbers=(((2,), (1,)), ((0,), (0,))),
            preferred_element_type=f32) * inv_denom
        ctx_heads.append(o_h)

    ctx = jnp.concatenate(ctx_heads, axis=-1).reshape(M, D)         # [M, D]

    # small per-layer vectors, read as ref rows
    bo  = vecs_ref[0:1, :]
    g1  = vecs_ref[1:2, :]
    be1 = vecs_ref[2:3, :]
    bf2 = vecs_ref[3:4, :]
    g2  = vecs_ref[4:5, :]
    be2 = vecs_ref[5:6, :]

    # ---------- output projection: one full-width matmul ----------
    attn = jnp.dot(ctx.astype(bf16), wo_ref[...],
                   preferred_element_type=f32) + bo                 # [M, D]

    # dropout1 -> identity (eval mode)
    out1 = _layer_norm(x2 + attn, g1, be1)

    # ---------- FeedForward ----------
    h1 = jnp.maximum(
        jnp.dot(out1.astype(bf16), w1_ref[...], preferred_element_type=f32)
        + bf1_ref[...], 0.0)
    # dropout (inside FF) -> identity
    ff = jnp.dot(h1.astype(bf16), w2_ref[...], preferred_element_type=f32) + bf2
    # dropout2 -> identity
    out2 = _layer_norm(out1 + ff, g2, be2)

    # carry to next layer (HBM writeback only when the batch block changes)
    o_ref[...] = out2.reshape(Bt, S, D).astype(o_ref.dtype)


def transformer_encoder(x, packed, num_heads, batch_block=None):
    """x: [B, S, D] f32; packed: stacked per-layer params (see pack_params)."""
    B, S, D = x.shape
    L = packed["wqkv"].shape[0]
    DFF = packed["w1"].shape[-1]

    if batch_block is None:
        # Keep the whole batch resident when the activation slab is small so the
        # per-layer weights are DMA'd exactly once per layer; otherwise split.
        batch_block = B
        while batch_block > 1 and (batch_block * S * D * 4 > 8 * 1024 * 1024
                                   or B % batch_block != 0):
            batch_block -= 1
    assert B % batch_block == 0
    nb = B // batch_block

    def wspec(shape):
        # Weights stacked as [L, *shape]; block selects layer l and squeezes it.
        return pl.BlockSpec((pl.Squeezed(),) + shape,
                            lambda b, l: (l,) + (0,) * len(shape))

    in_specs = [
        pl.BlockSpec((batch_block, S, D), lambda b, l: (b, 0, 0)),   # x
        wspec((D, 3 * D)),     # wqkv
        wspec((1, 3 * D)),     # bqkv
        wspec((D, D)),         # wo
        wspec((D, DFF)),       # w1
        wspec((1, DFF)),       # bf1
        wspec((DFF, D)),       # w2
        wspec((6, D)),         # bo, g1, be1, bf2, g2, be2
    ]
    out_spec = pl.BlockSpec((batch_block, S, D), lambda b, l: (b, 0, 0))

    kernel = functools.partial(fused_encoder_kernel, num_heads=num_heads)
    return pl.pallas_call(
        kernel,
        out_shape=jax.ShapeDtypeStruct((B, S, D), jnp.float32),
        grid_spec=pltpu.PrefetchScalarGridSpec(
            num_scalar_prefetch=0,
            grid=(nb, L),
            in_specs=in_specs,
            out_specs=out_spec,
        ),
        compiler_params=pltpu.CompilerParams(
            dimension_semantics=("parallel", "arbitrary"),
            vmem_limit_bytes=48 * 1024 * 1024,
        ),
    )(
        x,
        packed["wqkv"], packed["bqkv"], packed["wo"],
        packed["w1"], packed["bf1"], packed["w2"], packed["vecs"],
    )


# ---------------- host-side parameter packing ----------------
def pack_params(params, num_heads):
    """params: list of per-layer dicts, weights stored [in, out], biases [out]."""
    D = params[0]["wq"].shape[0]
    hd = D // num_heads
    scale = 1.0 / math.sqrt(hd)

    def per_layer(p):
        # Fold 1/sqrt(head_dim) into Wq / bq so the kernel never scales q.
        wqkv = jnp.concatenate([p["wq"] * scale, p["wk"], p["wv"]], axis=1)    # [D, 3D]
        bqkv = jnp.concatenate([p["bq"] * scale, p["bk"], p["bv"]]).reshape(1, -1)
        vecs = jnp.stack(
            [p["bo"], p["g1"], p["be1"], p["bf2"], p["g2"], p["be2"]], axis=0)
        return dict(wqkv=wqkv, bqkv=bqkv, wo=p["wo"], w1=p["w1"],
                    bf1=p["bf1"].reshape(1, -1), w2=p["w2"], vecs=vecs)

    layers = [per_layer(p) for p in params]
    stacked = {k: jnp.stack([lyr[k] for lyr in layers], axis=0) for k in layers[0]}
    # bf16 for MXU weight operands; biases / LayerNorm params stay f32.
    for k in ("wqkv", "wo", "w1", "w2"):
        stacked[k] = stacked[k].astype(jnp.bfloat16)
    return stacked


# ---------------- pure-JAX f32 reference (correctness check) ----------------
def _ref_layer(x, p, num_heads):
    B, S, D = x.shape
    hd = D // num_heads
    q = (x @ p["wq"] + p["bq"]).reshape(B, S, num_heads, hd).transpose(0, 2, 1, 3)
    k = (x @ p["wk"] + p["bk"]).reshape(B, S, num_heads, hd).transpose(0, 2, 1, 3)
    v = (x @ p["wv"] + p["bv"]).reshape(B, S, num_heads, hd).transpose(0, 2, 1, 3)
    s = jnp.einsum("bhqd,bhkd->bhqk", q, k) / math.sqrt(hd)
    a = jax.nn.softmax(s, axis=-1)
    o = jnp.einsum("bhqk,bhkd->bhqd", a, v).transpose(0, 2, 1, 3).reshape(B, S, D)
    o = o @ p["wo"] + p["bo"]
    out1 = _layer_norm(x + o, p["g1"], p["be1"])
    ff = jnp.maximum(out1 @ p["w1"] + p["bf1"], 0.0) @ p["w2"] + p["bf2"]
    return _layer_norm(out1 + ff, p["g2"], p["be2"])


def _ref_encoder(x, params, num_heads):
    for p in params:
        x = _ref_layer(x, p, num_heads)
    return x


def init_params(key, num_layers, d_model, d_ff):
    params = []
    for _ in range(num_layers):
        keys = jax.random.split(key, 17)
        key = keys[-1]
        s = 0.05

        def nrm(k, shape, scale=s):
            return jax.random.normal(k, shape, jnp.float32) * scale

        p = {
            "wq": nrm(keys[0], (d_model, d_model)),  "bq": nrm(keys[1], (d_model,)),
            "wk": nrm(keys[2], (d_model, d_model)),  "bk": nrm(keys[3], (d_model,)),
            "wv": nrm(keys[4], (d_model, d_model)),  "bv": nrm(keys[5], (d_model,)),
            "wo": nrm(keys[6], (d_model, d_model)),  "bo": nrm(keys[7], (d_model,)),
            "g1": 1.0 + nrm(keys[8], (d_model,), 0.02),
            "be1": nrm(keys[9], (d_model,), 0.02),
            "w1": nrm(keys[10], (d_model, d_ff)),    "bf1": nrm(keys[11], (d_ff,)),
            "w2": nrm(keys[12], (d_ff, d_model)),    "bf2": nrm(keys[13], (d_model,)),
            "g2": 1.0 + nrm(keys[14], (d_model,), 0.02),
            "be2": nrm(keys[15], (d_model,), 0.02),
        }
        params.append(p)
    return params


if __name__ == "__main__":
    # Small shapes: batch=2, seq=8, d_model=32, heads=4, d_ff=64, 2 layers.
    B, S, D, H, DFF, L = 2, 8, 32, 4, 64, 2

    key = jax.random.PRNGKey(0)
    kx, kp = jax.random.split(key)
    x = jax.random.normal(kx, (B, S, D), jnp.float32)
    params = init_params(kp, L, D, DFF)
    packed = pack_params(params, H)

    out = jax.block_until_ready(transformer_encoder(x, packed, H))
    ref = jax.block_until_ready(_ref_encoder(x, params, H))

    assert out.shape == (B, S, D)
    err = float(jnp.max(jnp.abs(out - ref)))
    # bf16 MXU inputs + approx reciprocal loosen the tolerance vs the f32 ref
    # (intentional: inference-grade numerics; use approx=False / f32 weights
    # if exact parity with the PyTorch f32 reference is required).
    assert err < 5e-2, f"mismatch vs reference: max abs err {err}"

    print("KERNEL_OK")
</pallas_src>

<mosaic_0001>
module attributes {stable_mosaic.version = 11 : i64} {
  func.func @fused_encoder_kernel(%arg0: i32, %arg1: i32, %arg2: memref<2x8x32xf32, #tpu.memory_space<vmem>>, %arg3: memref<1x32x96xbf16, #tpu.memory_space<vmem>>, %arg4: memref<1x1x96xf32, #tpu.memory_space<vmem>>, %arg5: memref<1x32x32xbf16, #tpu.memory_space<vmem>>, %arg6: memref<1x32x64xbf16, #tpu.memory_space<vmem>>, %arg7: memref<1x1x64xf32, #tpu.memory_space<vmem>>, %arg8: memref<1x64x32xbf16, #tpu.memory_space<vmem>>, %arg9: memref<1x6x32xf32, #tpu.memory_space<vmem>>, %arg10: memref<2x8x32xf32, #tpu.memory_space<vmem>>) attributes {dimension_semantics = [#tpu.dimension_semantics<parallel>, #tpu.dimension_semantics<arbitrary>], iteration_bounds = array<i64: 1, 2>, scalar_prefetch = 0 : i64, scratch_operands = 0 : i64, tpu.core_type = #tpu.core_type<tc>, window_params = [{transform_indices = @transform_0, window_bounds = array<i64: 2, 8, 32>}, {transform_indices = @transform_1, window_bounds = array<i64: 1, 32, 96>}, {transform_indices = @transform_2, window_bounds = array<i64: 1, 1, 96>}, {transform_indices = @transform_3, window_bounds = array<i64: 1, 32, 32>}, {transform_indices = @transform_4, window_bounds = array<i64: 1, 32, 64>}, {transform_indices = @transform_5, window_bounds = array<i64: 1, 1, 64>}, {transform_indices = @transform_6, window_bounds = array<i64: 1, 64, 32>}, {transform_indices = @transform_7, window_bounds = array<i64: 1, 6, 32>}, {transform_indices = @transform_8, window_bounds = array<i64: 2, 8, 32>}]} {
    %c0_i32 = arith.constant 0 : i32
    %0 = arith.cmpi eq, %arg1, %c0_i32 : i32
    %1 = arith.extui %0 : i1 to i32
    %c0_i32_0 = arith.constant 0 : i32
    %2 = arith.cmpi ne, %1, %c0_i32_0 : i32
    scf.if %2 {
      %c0_67 = arith.constant 0 : index
      %c0_68 = arith.constant 0 : index
      %c0_69 = arith.constant 0 : index
      %174 = vector.load %arg2[%c0_67, %c0_68, %c0_69] : memref<2x8x32xf32, #tpu.memory_space<vmem>>, vector<2x8x32xf32>
      %c0_70 = arith.constant 0 : index
      %c0_71 = arith.constant 0 : index
      %c0_72 = arith.constant 0 : index
      %175 = vector.load %arg10[%c0_70, %c0_71, %c0_72] : memref<2x8x32xf32, #tpu.memory_space<vmem>>, vector<2x8x32xf32>
      tpu.vector_store %arg10[%c0_70, %c0_71, %c0_72], %174 {strides = array<i32>} : memref<2x8x32xf32, #tpu.memory_space<vmem>>, vector<2x8x32xf32>,
    } else {
    }
    %c0 = arith.constant 0 : index
    %c0_1 = arith.constant 0 : index
    %c0_2 = arith.constant 0 : index
    %3 = vector.load %arg10[%c0, %c0_1, %c0_2] : memref<2x8x32xf32, #tpu.memory_space<vmem>>, vector<2x8x32xf32>
    %4 = vector.shape_cast %3 : vector<2x8x32xf32> to vector<16x32xf32>
    %5 = arith.truncf %4 : vector<16x32xf32> to vector<16x32xbf16>
    %c0_3 = arith.constant 0 : index
    %c0_4 = arith.constant 0 : index
    %c0_5 = arith.constant 0 : index
    %6 = vector.load %arg3[%c0_3, %c0_4, %c0_5] : memref<1x32x96xbf16, #tpu.memory_space<vmem>>, vector<1x32x96xbf16>
    %7 = vector.shape_cast %6 : vector<1x32x96xbf16> to vector<32x96xbf16>
    %cst = arith.constant dense<0.000000e+00> : vector<16x96xf32>
    %8 = tpu.matmul %5, %7, %cst {dimension_numbers = #tpu.dot_dimension_numbers<[1], [0], [0], [1], [0, 0, 1, 1], [], []>} : vector<16x32xbf16>, vector<32x96xbf16>, vector<16x96xf32> -> vector<16x96xf32>
    %c0_6 = arith.constant 0 : index
    %c0_7 = arith.constant 0 : index
    %c0_8 = arith.constant 0 : index
    %9 = vector.load %arg4[%c0_6, %c0_7, %c0_8] : memref<1x1x96xf32, #tpu.memory_space<vmem>>, vector<1x1x96xf32>
    %10 = vector.shape_cast %9 : vector<1x1x96xf32> to vector<1x96xf32>
    %11 = vector.broadcast %10 : vector<1x96xf32> to vector<16x96xf32>
    %12 = arith.addf %8, %11 : vector<16x96xf32>
    %13 = vector.shape_cast %12 : vector<16x96xf32> to vector<2x8x96xf32>
    %14 = vector.extract_strided_slice %13 {offsets = [0, 0, 0], sizes = [2, 8, 8], strides = [1, 1, 1]} : vector<2x8x96xf32> to vector<2x8x8xf32>
    %15 = vector.extract_strided_slice %13 {offsets = [0, 0, 32], sizes = [2, 8, 8], strides = [1, 1, 1]} : vector<2x8x96xf32> to vector<2x8x8xf32>
    %16 = vector.extract_strided_slice %13 {offsets = [0, 0, 64], sizes = [2, 8, 8], strides = [1, 1, 1]} : vector<2x8x96xf32> to vector<2x8x8xf32>
    %17 = arith.truncf %14 : vector<2x8x8xf32> to vector<2x8x8xbf16>
    %18 = arith.truncf %15 : vector<2x8x8xf32> to vector<2x8x8xbf16>
    %cst_9 = arith.constant dense<0.000000e+00> : vector<2x8x8xf32>
    %19 = tpu.matmul %17, %18, %cst_9 {dimension_numbers = #tpu.dot_dimension_numbers<[2], [2], [1], [1], [0, 0, 0, 1, 1, 1], [0], [0]>} : vector<2x8x8xbf16>, vector<2x8x8xbf16>, vector<2x8x8xf32> -> vector<2x8x8xf32>
    %cst_10 = arith.constant dense<0xFF800000> : vector<2x8xf32>
    %20 = vector.multi_reduction <maximumf>, %19, %cst_10 [2] : vector<2x8x8xf32> to vector<2x8xf32>
    %21 = vector.shape_cast %20 : vector<2x8xf32> to vector<2x8x1xf32>
    %22 = vector.broadcast %21 : vector<2x8x1xf32> to vector<2x8x8xf32>
    %23 = arith.subf %19, %22 : vector<2x8x8xf32>
    %24 = math.exp %23 : vector<2x8x8xf32>
    %cst_11 = arith.constant dense<0.000000e+00> : vector<2x8xf32>
    %25 = vector.multi_reduction <add>, %24, %cst_11 [2] : vector<2x8x8xf32> to vector<2x8xf32>
    %26 = vector.shape_cast %25 : vector<2x8xf32> to vector<2x8x1xf32>
    %27 = tpu.reciprocal %26 {approx = true} : vector<2x8x1xf32> -> vector<2x8x1xf32>
    %28 = arith.truncf %24 : vector<2x8x8xf32> to vector<2x8x8xbf16>
    %29 = arith.truncf %16 : vector<2x8x8xf32> to vector<2x8x8xbf16>
    %cst_12 = arith.constant dense<0.000000e+00> : vector<2x8x8xf32>
    %30 = tpu.matmul %28, %29, %cst_12 {dimension_numbers = #tpu.dot_dimension_numbers<[2], [1], [1], [2], [0, 0, 0, 1, 1, 2], [0], [0]>} : vector<2x8x8xbf16>, vector<2x8x8xbf16>, vector<2x8x8xf32> -> vector<2x8x8xf32>
    %31 = vector.broadcast %27 : vector<2x8x1xf32> to vector<2x8x8xf32>
    %32 = arith.mulf %30, %31 : vector<2x8x8xf32>
    %33 = vector.extract_strided_slice %13 {offsets = [0, 0, 8], sizes = [2, 8, 8], strides = [1, 1, 1]} : vector<2x8x96xf32> to vector<2x8x8xf32>
    %34 = vector.extract_strided_slice %13 {offsets = [0, 0, 40], sizes = [2, 8, 8], strides = [1, 1, 1]} : vector<2x8x96xf32> to vector<2x8x8xf32>
    %35 = vector.extract_strided_slice %13 {offsets = [0, 0, 72], sizes = [2, 8, 8], strides = [1, 1, 1]} : vector<2x8x96xf32> to vector<2x8x8xf32>
    %36 = arith.truncf %33 : vector<2x8x8xf32> to vector<2x8x8xbf16>
    %37 = arith.truncf %34 : vector<2x8x8xf32> to vector<2x8x8xbf16>
    %cst_13 = arith.constant dense<0.000000e+00> : vector<2x8x8xf32>
    %38 = tpu.matmul %36, %37, %cst_13 {dimension_numbers = #tpu.dot_dimension_numbers<[2], [2], [1], [1], [0, 0, 0, 1, 1, 1], [0], [0]>} : vector<2x8x8xbf16>, vector<2x8x8xbf16>, vector<2x8x8xf32> -> vector<2x8x8xf32>
    %cst_14 = arith.constant dense<0xFF800000> : vector<2x8xf32>
    %39 = vector.multi_reduction <maximumf>, %38, %cst_14 [2] : vector<2x8x8xf32> to vector<2x8xf32>
    %40 = vector.shape_cast %39 : vector<2x8xf32> to vector<2x8x1xf32>
    %41 = vector.broadcast %40 : vector<2x8x1xf32> to vector<2x8x8xf32>
    %42 = arith.subf %38, %41 : vector<2x8x8xf32>
    %43 = math.exp %42 : vector<2x8x8xf32>
    %cst_15 = arith.constant dense<0.000000e+00> : vector<2x8xf32>
    %44 = vector.multi_reduction <add>, %43, %cst_15 [2] : vector<2x8x8xf32> to vector<2x8xf32>
    %45 = vector.shape_cast %44 : vector<2x8xf32> to vector<2x8x1xf32>
    %46 = tpu.reciprocal %45 {approx = true} : vector<2x8x1xf32> -> vector<2x8x1xf32>
    %47 = arith.truncf %43 : vector<2x8x8xf32> to vector<2x8x8xbf16>
    %48 = arith.truncf %35 : vector<2x8x8xf32> to vector<2x8x8xbf16>
    %cst_16 = arith.constant dense<0.000000e+00> : vector<2x8x8xf32>
    %49 = tpu.matmul %47, %48, %cst_16 {dimension_numbers = #tpu.dot_dimension_numbers<[2], [1], [1], [2], [0, 0, 0, 1, 1, 2], [0], [0]>} : vector<2x8x8xbf16>, vector<2x8x8xbf16>, vector<2x8x8xf32> -> vector<2x8x8xf32>
    %50 = vector.broadcast %46 : vector<2x8x1xf32> to vector<2x8x8xf32>
    %51 = arith.mulf %49, %50 : vector<2x8x8xf32>
    %52 = vector.extract_strided_slice %13 {offsets = [0, 0, 16], sizes = [2, 8, 8], strides = [1, 1, 1]} : vector<2x8x96xf32> to vector<2x8x8xf32>
    %53 = vector.extract_strided_slice %13 {offsets = [0, 0, 48], sizes = [2, 8, 8], strides = [1, 1, 1]} : vector<2x8x96xf32> to vector<2x8x8xf32>
    %54 = vector.extract_strided_slice %13 {offsets = [0, 0, 80], sizes = [2, 8, 8], strides = [1, 1, 1]} : vector<2x8x96xf32> to vector<2x8x8xf32>
    %55 = arith.truncf %52 : vector<2x8x8xf32> to vector<2x8x8xbf16>
    %56 = arith.truncf %53 : vector<2x8x8xf32> to vector<2x8x8xbf16>
    %cst_17 = arith.constant dense<0.000000e+00> : vector<2x8x8xf32>
    %57 = tpu.matmul %55, %56, %cst_17 {dimension_numbers = #tpu.dot_dimension_numbers<[2], [2], [1], [1], [0, 0, 0, 1, 1, 1], [0], [0]>} : vector<2x8x8xbf16>, vector<2x8x8xbf16>, vector<2x8x8xf32> -> vector<2x8x8xf32>
    %cst_18 = arith.constant dense<0xFF800000> : vector<2x8xf32>
    %58 = vector.multi_reduction <maximumf>, %57, %cst_18 [2] : vector<2x8x8xf32> to vector<2x8xf32>
    %59 = vector.shape_cast %58 : vector<2x8xf32> to vector<2x8x1xf32>
    %60 = vector.broadcast %59 : vector<2x8x1xf32> to vector<2x8x8xf32>
    %61 = arith.subf %57, %60 : vector<2x8x8xf32>
    %62 = math.exp %61 : vector<2x8x8xf32>
    %cst_19 = arith.constant dense<0.000000e+00> : vector<2x8xf32>
    %63 = vector.multi_reduction <add>, %62, %cst_19 [2] : vector<2x8x8xf32> to vector<2x8xf32>
    %64 = vector.shape_cast %63 : vector<2x8xf32> to vector<2x8x1xf32>
    %65 = tpu.reciprocal %64 {approx = true} : vector<2x8x1xf32> -> vector<2x8x1xf32>
    %66 = arith.truncf %62 : vector<2x8x8xf32> to vector<2x8x8xbf16>
    %67 = arith.truncf %54 : vector<2x8x8xf32> to vector<2x8x8xbf16>
    %cst_20 = arith.constant dense<0.000000e+00> : vector<2x8x8xf32>
    %68 = tpu.matmul %66, %67, %cst_20 {dimension_numbers = #tpu.dot_dimension_numbers<[2], [1], [1], [2], [0, 0, 0, 1, 1, 2], [0], [0]>} : vector<2x8x8xbf16>, vector<2x8x8xbf16>, vector<2x8x8xf32> -> vector<2x8x8xf32>
    %69 = vector.broadcast %65 : vector<2x8x1xf32> to vector<2x8x8xf32>
    %70 = arith.mulf %68, %69 : vector<2x8x8xf32>
    %71 = vector.extract_strided_slice %13 {offsets = [0, 0, 24], sizes = [2, 8, 8], strides = [1, 1, 1]} : vector<2x8x96xf32> to vector<2x8x8xf32>
    %72 = vector.extract_strided_slice %13 {offsets = [0, 0, 56], sizes = [2, 8, 8], strides = [1, 1, 1]} : vector<2x8x96xf32> to vector<2x8x8xf32>
    %73 = vector.extract_strided_slice %13 {offsets = [0, 0, 88], sizes = [2, 8, 8], strides = [1, 1, 1]} : vector<2x8x96xf32> to vector<2x8x8xf32>
    %74 = arith.truncf %71 : vector<2x8x8xf32> to vector<2x8x8xbf16>
    %75 = arith.truncf %72 : vector<2x8x8xf32> to vector<2x8x8xbf16>
    %cst_21 = arith.constant dense<0.000000e+00> : vector<2x8x8xf32>
    %76 = tpu.matmul %74, %75, %cst_21 {dimension_numbers = #tpu.dot_dimension_numbers<[2], [2], [1], [1], [0, 0, 0, 1, 1, 1], [0], [0]>} : vector<2x8x8xbf16>, vector<2x8x8xbf16>, vector<2x8x8xf32> -> vector<2x8x8xf32>
    %cst_22 = arith.constant dense<0xFF800000> : vector<2x8xf32>
    %77 = vector.multi_reduction <maximumf>, %76, %cst_22 [2] : vector<2x8x8xf32> to vector<2x8xf32>
    %78 = vector.shape_cast %77 : vector<2x8xf32> to vector<2x8x1xf32>
    %79 = vector.broadcast %78 : vector<2x8x1xf32> to vector<2x8x8xf32>
    %80 = arith.subf %76, %79 : vector<2x8x8xf32>
    %81 = math.exp %80 : vector<2x8x8xf32>
    %cst_23 = arith.constant dense<0.000000e+00> : vector<2x8xf32>
    %82 = vector.multi_reduction <add>, %81, %cst_23 [2] : vector<2x8x8xf32> to vector<2x8xf32>
    %83 = vector.shape_cast %82 : vector<2x8xf32> to vector<2x8x1xf32>
    %84 = tpu.reciprocal %83 {approx = true} : vector<2x8x1xf32> -> vector<2x8x1xf32>
    %85 = arith.truncf %81 : vector<2x8x8xf32> to vector<2x8x8xbf16>
    %86 = arith.truncf %73 : vector<2x8x8xf32> to vector<2x8x8xbf16>
    %cst_24 = arith.constant dense<0.000000e+00> : vector<2x8x8xf32>
    %87 = tpu.matmul %85, %86, %cst_24 {dimension_numbers = #tpu.dot_dimension_numbers<[2], [1], [1], [2], [0, 0, 0, 1, 1, 2], [0], [0]>} : vector<2x8x8xbf16>, vector<2x8x8xbf16>, vector<2x8x8xf32> -> vector<2x8x8xf32>
    %88 = vector.broadcast %84 : vector<2x8x1xf32> to vector<2x8x8xf32>
    %89 = arith.mulf %87, %88 : vector<2x8x8xf32>
    %90 = tpu.concatenate %32, %51, %70, %89 in 2 : vector<2x8x8xf32>, vector<2x8x8xf32>, vector<2x8x8xf32>, vector<2x8x8xf32> -> vector<2x8x32xf32>
    %91 = vector.shape_cast %90 : vector<2x8x32xf32> to vector<16x32xf32>
    %c0_25 = arith.constant 0 : index
    %c0_26 = arith.constant 0 : index
    %c0_27 = arith.constant 0 : index
    %92 = vector.load %arg9[%c0_25, %c0_26, %c0_27] : memref<1x6x32xf32, #tpu.memory_space<vmem>>, vector<1x1x32xf32>
    %93 = vector.shape_cast %92 : vector<1x1x32xf32> to vector<1x32xf32>
    %c0_28 = arith.constant 0 : index
    %c1 = arith.constant 1 : index
    %c0_29 = arith.constant 0 : index
    %94 = vector.load %arg9[%c0_28, %c1, %c0_29] : memref<1x6x32xf32, #tpu.memory_space<vmem>>, vector<1x1x32xf32>
    %95 = vector.shape_cast %94 : vector<1x1x32xf32> to vector<1x32xf32>
    %c0_30 = arith.constant 0 : index
    %c2 = arith.constant 2 : index
    %c0_31 = arith.constant 0 : index
    %96 = vector.load %arg9[%c0_30, %c2, %c0_31] : memref<1x6x32xf32, #tpu.memory_space<vmem>>, vector<1x1x32xf32>
    %97 = vector.shape_cast %96 : vector<1x1x32xf32> to vector<1x32xf32>
    %c0_32 = arith.constant 0 : index
    %c3 = arith.constant 3 : index
    %c0_33 = arith.constant 0 : index
    %98 = vector.load %arg9[%c0_32, %c3, %c0_33] : memref<1x6x32xf32, #tpu.memory_space<vmem>>, vector<1x1x32xf32>
    %99 = vector.shape_cast %98 : vector<1x1x32xf32> to vector<1x32xf32>
    %c0_34 = arith.constant 0 : index
    %c4 = arith.constant 4 : index
    %c0_35 = arith.constant 0 : index
    %100 = vector.load %arg9[%c0_34, %c4, %c0_35] : memref<1x6x32xf32, #tpu.memory_space<vmem>>, vector<1x1x32xf32>
    %101 = vector.shape_cast %100 : vector<1x1x32xf32> to vector<1x32xf32>
    %c0_36 = arith.constant 0 : index
    %c5 = arith.constant 5 : index
    %c0_37 = arith.constant 0 : index
    %102 = vector.load %arg9[%c0_36, %c5, %c0_37] : memref<1x6x32xf32, #tpu.memory_space<vmem>>, vector<1x1x32xf32>
    %103 = vector.shape_cast %102 : vector<1x1x32xf32> to vector<1x32xf32>
    %104 = arith.truncf %91 : vector<16x32xf32> to vector<16x32xbf16>
    %c0_38 = arith.constant 0 : index
    %c0_39 = arith.constant 0 : index
    %c0_40 = arith.constant 0 : index
    %105 = vector.load %arg5[%c0_38, %c0_39, %c0_40] : memref<1x32x32xbf16, #tpu.memory_space<vmem>>, vector<1x32x32xbf16>
    %106 = vector.shape_cast %105 : vector<1x32x32xbf16> to vector<32x32xbf16>
    %cst_41 = arith.constant dense<0.000000e+00> : vector<16x32xf32>
    %107 = tpu.matmul %104, %106, %cst_41 {dimension_numbers = #tpu.dot_dimension_numbers<[1], [0], [0], [1], [0, 0, 1, 1], [], []>} : vector<16x32xbf16>, vector<32x32xbf16>, vector<16x32xf32> -> vector<16x32xf32>
    %108 = vector.broadcast %93 : vector<1x32xf32> to vector<16x32xf32>
    %109 = arith.addf %107, %108 : vector<16x32xf32>
    %110 = arith.addf %4, %109 : vector<16x32xf32>
    %cst_42 = arith.constant dense<0.000000e+00> : vector<16xf32>
    %111 = vector.multi_reduction <add>, %110, %cst_42 [1] : vector<16x32xf32> to vector<16xf32>
    %112 = vector.shape_cast %111 : vector<16xf32> to vector<16x1xf32>
    %cst_43 = arith.constant 3.200000e+01 : f32
    %113 = vector.broadcast %cst_43 : f32 to vector<16x1xf32>
    %114 = arith.divf %112, %113 : vector<16x1xf32>
    %115 = vector.broadcast %114 : vector<16x1xf32> to vector<16x32xf32>
    %116 = arith.subf %110, %115 : vector<16x32xf32>
    %117 = arith.mulf %116, %116 : vector<16x32xf32>
    %cst_44 = arith.constant dense<0.000000e+00> : vector<16xf32>
    %118 = vector.multi_reduction <add>, %117, %cst_44 [1] : vector<16x32xf32> to vector<16xf32>
    %119 = vector.shape_cast %118 : vector<16xf32> to vector<16x1xf32>
    %cst_45 = arith.constant 3.200000e+01 : f32
    %120 = vector.broadcast %cst_45 : f32 to vector<16x1xf32>
    %121 = arith.divf %119, %120 : vector<16x1xf32>
    %122 = vector.broadcast %114 : vector<16x1xf32> to vector<16x32xf32>
    %123 = arith.subf %110, %122 : vector<16x32xf32>
    %cst_46 = arith.constant 9.99999974E-6 : f32
    %124 = vector.broadcast %cst_46 : f32 to vector<16x1xf32>
    %125 = arith.addf %121, %124 : vector<16x1xf32>
    %126 = math.rsqrt %125 : vector<16x1xf32>
    %127 = vector.broadcast %126 : vector<16x1xf32> to vector<16x32xf32>
    %128 = arith.mulf %123, %127 : vector<16x32xf32>
    %129 = vector.broadcast %95 : vector<1x32xf32> to vector<16x32xf32>
    %130 = arith.mulf %128, %129 : vector<16x32xf32>
    %131 = vector.broadcast %97 : vector<1x32xf32> to vector<16x32xf32>
    %132 = arith.addf %130, %131 : vector<16x32xf32>
    %133 = arith.truncf %132 : vector<16x32xf32> to vector<16x32xbf16>
    %c0_47 = arith.constant 0 : index
    %c0_48 = arith.constant 0 : index
    %c0_49 = arith.constant 0 : index
    %134 = vector.load %arg6[%c0_47, %c0_48, %c0_49] : memref<1x32x64xbf16, #tpu.memory_space<vmem>>, vector<1x32x64xbf16>
    %135 = vector.shape_cast %134 : vector<1x32x64xbf16> to vector<32x64xbf16>
    %cst_50 = arith.constant dense<0.000000e+00> : vector<16x64xf32>
    %136 = tpu.matmul %133, %135, %cst_50 {dimension_numbers = #tpu.dot_dimension_numbers<[1], [0], [0], [1], [0, 0, 1, 1], [], []>} : vector<16x32xbf16>, vector<32x64xbf16>, vector<16x64xf32> -> vector<16x64xf32>
    %c0_51 = arith.constant 0 : index
    %c0_52 = arith.constant 0 : index
    %c0_53 = arith.constant 0 : index
    %137 = vector.load %arg7[%c0_51, %c0_52, %c0_53] : memref<1x1x64xf32, #tpu.memory_space<vmem>>, vector<1x1x64xf32>
    %138 = vector.shape_cast %137 : vector<1x1x64xf32> to vector<1x64xf32>
    %139 = vector.broadcast %138 : vector<1x64xf32> to vector<16x64xf32>
    %140 = arith.addf %136, %139 : vector<16x64xf32>
    %cst_54 = arith.constant 0.000000e+00 : f32
    %141 = vector.broadcast %cst_54 : f32 to vector<16x64xf32>
    %142 = arith.maximumf %140, %141 : vector<16x64xf32>
    %143 = arith.truncf %142 : vector<16x64xf32> to vector<16x64xbf16>
    %c0_55 = arith.constant 0 : index
    %c0_56 = arith.constant 0 : index
    %c0_57 = arith.constant 0 : index
    %144 = vector.load %arg8[%c0_55, %c0_56, %c0_57] : memref<1x64x32xbf16, #tpu.memory_space<vmem>>, vector<1x64x32xbf16>
    %145 = vector.shape_cast %144 : vector<1x64x32xbf16> to vector<64x32xbf16>
    %cst_58 = arith.constant dense<0.000000e+00> : vector<16x32xf32>
    %146 = tpu.matmul %143, %145, %cst_58 {dimension_numbers = #tpu.dot_dimension_numbers<[1], [0], [0], [1], [0, 0, 1, 1], [], []>} : vector<16x64xbf16>, vector<64x32xbf16>, vector<16x32xf32> -> vector<16x32xf32>
    %147 = vector.broadcast %99 : vector<1x32xf32> to vector<16x32xf32>
    %148 = arith.addf %146, %147 : vector<16x32xf32>
    %149 = arith.addf %132, %148 : vector<16x32xf32>
    %cst_59 = arith.constant dense<0.000000e+00> : vector<16xf32>
    %150 = vector.multi_reduction <add>, %149, %cst_59 [1] : vector<16x32xf32> to vector<16xf32>
    %151 = vector.shape_cast %150 : vector<16xf32> to vector<16x1xf32>
    %cst_60 = arith.constant 3.200000e+01 : f32
    %152 = vector.broadcast %cst_60 : f32 to vector<16x1xf32>
    %153 = arith.divf %151, %152 : vector<16x1xf32>
    %154 = vector.broadcast %153 : vector<16x1xf32> to vector<16x32xf32>
    %155 = arith.subf %149, %154 : vector<16x32xf32>
    %156 = arith.mulf %155, %155 : vector<16x32xf32>
    %cst_61 = arith.constant dense<0.000000e+00> : vector<16xf32>
    %157 = vector.multi_reduction <add>, %156, %cst_61 [1] : vector<16x32xf32> to vector<16xf32>
    %158 = vector.shape_cast %157 : vector<16xf32> to vector<16x1xf32>
    %cst_62 = arith.constant 3.200000e+01 : f32
    %159 = vector.broadcast %cst_62 : f32 to vector<16x1xf32>
    %160 = arith.divf %158, %159 : vector<16x1xf32>
    %161 = vector.broadcast %153 : vector<16x1xf32> to vector<16x32xf32>
    %162 = arith.subf %149, %161 : vector<16x32xf32>
    %cst_63 = arith.constant 9.99999974E-6 : f32
    %163 = vector.broadcast %cst_63 : f32 to vector<16x1xf32>
    %164 = arith.addf %160, %163 : vector<16x1xf32>
    %165 = math.rsqrt %164 : vector<16x1xf32>
    %166 = vector.broadcast %165 : vector<16x1xf32> to vector<16x32xf32>
    %167 = arith.mulf %162, %166 : vector<16x32xf32>
    %168 = vector.broadcast %101 : vector<1x32xf32> to vector<16x32xf32>
    %169 = arith.mulf %167, %168 : vector<16x32xf32>
    %170 = vector.broadcast %103 : vector<1x32xf32> to vector<16x32xf32>
    %171 = arith.addf %169, %170 : vector<16x32xf32>
    %172 = vector.shape_cast %171 : vector<16x32xf32> to vector<2x8x32xf32>
    %c0_64 = arith.constant 0 : index
    %c0_65 = arith.constant 0 : index
    %c0_66 = arith.constant 0 : index
    %173 = vector.load %arg10[%c0_64, %c0_65, %c0_66] : memref<2x8x32xf32, #tpu.memory_space<vmem>>, vector<2x8x32xf32>
    tpu.vector_store %arg10[%c0_64, %c0_65, %c0_66], %172 {strides = array<i32>} : memref<2x8x32xf32, #tpu.memory_space<vmem>>, vector<2x8x32xf32>,
    return
  }
  func.func @transform_0(%arg0: i32, %arg1: i32) -> (i32, i32, i32) {
    %c0_i32 = arith.constant 0 : i32
    %c0_i32_0 = arith.constant 0 : i32
    %c0_i32_1 = arith.constant 0 : i32
    return %arg0, %c0_i32, %c0_i32_0 : i32, i32, i32
  }
  func.func @transform_1(%arg0: i32, %arg1: i32) -> (i32, i32, i32) {
    %c0_i32 = arith.constant 0 : i32
    %c0_i32_0 = arith.constant 0 : i32
    %c0_i32_1 = arith.constant 0 : i32
    return %arg1, %c0_i32, %c0_i32_0 : i32, i32, i32
  }
  func.func @transform_2(%arg0: i32, %arg1: i32) -> (i32, i32, i32) {
    %c0_i32 = arith.constant 0 : i32
    %c0_i32_0 = arith.constant 0 : i32
    %c0_i32_1 = arith.constant 0 : i32
    return %arg1, %c0_i32, %c0_i32_0 : i32, i32, i32
  }
  func.func @transform_3(%arg0: i32, %arg1: i32) -> (i32, i32, i32) {
    %c0_i32 = arith.constant 0 : i32
    %c0_i32_0 = arith.constant 0 : i32
    %c0_i32_1 = arith.constant 0 : i32
    return %arg1, %c0_i32, %c0_i32_0 : i32, i32, i32
  }
  func.func @transform_4(%arg0: i32, %arg1: i32) -> (i32, i32, i32) {
    %c0_i32 = arith.constant 0 : i32
    %c0_i32_0 = arith.constant 0 : i32
    %c0_i32_1 = arith.constant 0 : i32
    return %arg1, %c0_i32, %c0_i32_0 : i32, i32, i32
  }
  func.func @transform_5(%arg0: i32, %arg1: i32) -> (i32, i32, i32) {
    %c0_i32 = arith.constant 0 : i32
    %c0_i32_0 = arith.constant 0 : i32
    %c0_i32_1 = arith.constant 0 : i32
    return %arg1, %c0_i32, %c0_i32_0 : i32, i32, i32
  }
  func.func @transform_6(%arg0: i32, %arg1: i32) -> (i32, i32, i32) {
    %c0_i32 = arith.constant 0 : i32
    %c0_i32_0 = arith.constant 0 : i32
    %c0_i32_1 = arith.constant 0 : i32
    return %arg1, %c0_i32, %c0_i32_0 : i32, i32, i32
  }
  func.func @transform_7(%arg0: i32, %arg1: i32) -> (i32, i32, i32) {
    %c0_i32 = arith.constant 0 : i32
    %c0_i32_0 = arith.constant 0 : i32
    %c0_i32_1 = arith.constant 0 : i32
    return %arg1, %c0_i32, %c0_i32_0 : i32, i32, i32
  }
  func.func @transform_8(%arg0: i32, %arg1: i32) -> (i32, i32, i32) {
    %c0_i32 = arith.constant 0 : i32
    %c0_i32_0 = arith.constant 0 : i32
    %c0_i32_1 = arith.constant 0 : i32
    return %arg0, %c0_i32, %c0_i32_0 : i32, i32, i32
  }
}

</mosaic_0001>

<llo_original>
// kernel: tpu_custom_call.1
$region0: #{tpu_custom_call.1}
  #allocation0 [shape = 'u32[]', space=smem, size = 0x4, offset = 0x4, fixed_abs, tag = 'smem constant byte address 0x4 - core index']
  #allocation1 [shape = 'u32[144,128]{1,0:T(1,128)}', space=vmem, size = 0x12000, scoped, tag = 'internal scratch']
  %s0 = inlined_call_operand.vmem [shape: f32[2,8,32], index: 0, kind: input, shape index: {}]
  %s1 = inlined_call_operand.vmem [shape: bf16[2,32,96], index: 1, kind: input, shape index: {}]
  %s2 = inlined_call_operand.vmem [shape: f32[2,1,96], index: 2, kind: input, shape index: {}]
  %s3 = inlined_call_operand.vmem [shape: bf16[2,32,32], index: 3, kind: input, shape index: {}]
  %s4 = inlined_call_operand.vmem [shape: bf16[2,32,64], index: 4, kind: input, shape index: {}]
  %s5 = inlined_call_operand.hbm [shape: f32[2,1,64], index: 5, kind: input, shape index: {}]
  %s6 = inlined_call_operand.vmem [shape: bf16[2,64,32], index: 6, kind: input, shape index: {}]
  %s7 = inlined_call_operand.vmem [shape: f32[2,6,32], index: 7, kind: input, shape index: {}]
  %s8 = inlined_call_operand.hbm [shape: f32[2,8,32], index: 8, kind: output, shape index: {}]
  %s9 = sld [smem:[#allocation0]]
  $region73: #{tpu_custom_call.1} parent=0
    _
  %s11 = ssub.s32 1, %s9
  %s12 = scalar_select 0, %s11, %s9
  $region1: #{tpu_custom_call.1} parent=0
    #allocation2 [shape = 'u8[1024]{0}', space=vmem, size = 0x400, scoped, tag = 'input window, operand 5']
    #allocation3 [shape = 's32[2]{0}', space=sflag, size = 0x8, scoped, tag = 'scoped memory for tpu_custom_call.1']
    #allocation4 [shape = 's32[2]{0}', space=sflag, size = 0x8, scoped, tag = 'scoped memory for tpu_custom_call.1']
    #allocation5 [shape = 'u8[8192]{0}', space=vmem, size = 0x2000, scoped, tag = 'output window, operand 0, single buffered']
    %13 = vsyncpa [#allocation3], 0
    %s14 = scalar_lea.sflag [#allocation3], 1
    %15 = vsyncpa %s14, 0
    %16 = vsyncpa [#allocation4], 0
    loop: start=0, step=1, limit=4
    $region2: #{tpu_custom_call.1} parent=1 // loop_pre_header
      _
    $region3: #{tpu_custom_call.1} parent=1 // loop_header
      %s18 = sphi 0, %s22
      %p19 = scmp.ge.s32.totalorder %s18, 4
      %s25 = sphi 0, %s37
      %s26 = sphi 0, %s33
      %s27 = sphi 0, %s25
      %s28 = sphi 0, %s26
      %s29 = sphi 0, %s27
      %s30 = sphi 0, %s28
      %s40 = sphi 0, %s42
      %s43 = sphi 0, %s40
      %s44 = sphi 0, %s43
      %s60 = sphi 0, %s44
      %s66 = sphi 0, %s68
      %s69 = sphi 0, %s66
      %s70 = sphi 0, %s69
      %s86 = sphi 0, %s70
      %s92 = sphi 0, %s94
      %s95 = sphi 0, %s92
      %s96 = sphi 0, %s95
      %s112 = sphi 0, %s96
      %s118 = sphi 0, %s120
      %s121 = sphi 0, %s118
      %s122 = sphi 0, %s121
      %s138 = sphi 0, %s122
      %s144 = sphi 0, %s146
      %s147 = sphi 0, %s144
      %s148 = sphi 0, %s147
      %s164 = sphi 0, %s148
      %s170 = sphi 0, %s172
      %s173 = sphi 0, %s170
      %s174 = sphi 0, %s173
      %s190 = sphi 0, %s174
      %s196 = sphi 0, %s198
      %s199 = sphi 0, %s196
      %s200 = sphi 0, %s199
      %s216 = sphi 0, %s200
      %s222 = sphi 0, %s224
      %s225 = sphi 0, %s222
      %s226 = sphi 0, %s225
      %s242 = sphi 0, %s226
      %s248 = sphi 0, %s250
      %s251 = sphi 0, %s248
      %s252 = sphi 0, %s251
      %s268 = sphi 0, %s252
    $region4: #{tpu_custom_call.1} parent=1 // loop_header_branch
      %21 = sbr.rel (%p19) target = $region8
    $region5: #{tpu_custom_call.1} parent=1 // loop_body
      %s23 = ssub.s32 %s18, 1
      %s24 = ssub.s32 %s18, 2
      %s31 = sadd.s32 1, %s26
      %p32 = scmp.ge.s32.totalorder %s31, 2
      %s33 = scalar_select %p32, 0, %s31
      %s34 = sadd.s32 1, %s25
      %s35 = scalar_select %p32, %s34, %s25
      %p36 = scmp.ge.s32.totalorder %s35, 1
      %s37 = scalar_select %p36, 0, %s35
      %s38 = ssub.s32 %s25, %s37
      %p39 = scmp.eq.s32.totalorder %s38, 0
      %s41 = sadd.s32 %s40, 1
      %s42 = scalar_select %p39, %s40, %s41
      %p45 = pneg %p39
      %p46 = scmp.eq.s32.totalorder %s18, 1
      %p47 = por %p45, %p46
      %p48 = scmp.ne.s32.totalorder %s40, %s43
      %p49 = scmp.eq.s32.totalorder %s18, 0
      %p50 = por %p48, %p49
      %p51 = scmp.ne.s32.totalorder %s40, %s43
      %p52 = scmp.eq.s32.totalorder %s23, 1
      %p53 = por %p51, %p52
      %p54 = scmp.ne.s32.totalorder %s43, %s44
      %p55 = scmp.eq.s32.totalorder %s23, 0
      %p56 = por %p54, %p55
      %p57 = scmp.ne.s32.totalorder %s43, %s44
      %p58 = scmp.eq.s32.totalorder %s24, 1
      %p59 = por %p57, %p58
      %p61 = scmp.ne.s32.totalorder %s44, %s60
      %p62 = scmp.eq.s32.totalorder %s24, 0
      %p63 = por %p61, %p62
      %s64 = ssub.s32 %s26, %s33
      %p65 = scmp.eq.s32.totalorder %s64, 0
      %s67 = sadd.s32 %s66, 1
      %s68 = scalar_select %p65, %s66, %s67
      %p71 = pneg %p65
      %p72 = scmp.eq.s32.totalorder %s18, 1
      %p73 = por %p71, %p72
      %p74 = scmp.ne.s32.totalorder %s66, %s69
      %p75 = scmp.eq.s32.totalorder %s18, 0
      %p76 = por %p74, %p75
      %p77 = scmp.ne.s32.totalorder %s66, %s69
      %p78 = scmp.eq.s32.totalorder %s23, 1
      %p79 = por %p77, %p78
      %p80 = scmp.ne.s32.totalorder %s69, %s70
      %p81 = scmp.eq.s32.totalorder %s23, 0
      %p82 = por %p80, %p81
      %p83 = scmp.ne.s32.totalorder %s69, %s70
      %p84 = scmp.eq.s32.totalorder %s24, 1
      %p85 = por %p83, %p84
      %p87 = scmp.ne.s32.totalorder %s70, %s86
      %p88 = scmp.eq.s32.totalorder %s24, 0
      %p89 = por %p87, %p88
      %s90 = ssub.s32 %s26, %s33
      %p91 = scmp.eq.s32.totalorder %s90, 0
      %s93 = sadd.s32 %s92, 1
      %s94 = scalar_select %p91, %s92, %s93
      %p97 = pneg %p91
      %p98 = scmp.eq.s32.totalorder %s18, 1
      %p99 = por %p97, %p98
      %p100 = scmp.ne.s32.totalorder %s92, %s95
      %p101 = scmp.eq.s32.totalorder %s18, 0
      %p102 = por %p100, %p101
      %p103 = scmp.ne.s32.totalorder %s92, %s95
      %p104 = scmp.eq.s32.totalorder %s23, 1
      %p105 = por %p103, %p104
      %p106 = scmp.ne.s32.totalorder %s95, %s96
      %p107 = scmp.eq.s32.totalorder %s23, 0
      %p108 = por %p106, %p107
      %p109 = scmp.ne.s32.totalorder %s95, %s96
      %p110 = scmp.eq.s32.totalorder %s24, 1
      %p111 = por %p109, %p110
      %p113 = scmp.ne.s32.totalorder %s96, %s112
      %p114 = scmp.eq.s32.totalorder %s24, 0
      %p115 = por %p113, %p114
      %s116 = ssub.s32 %s26, %s33
      %p117 = scmp.eq.s32.totalorder %s116, 0
      %s119 = sadd.s32 %s118, 1
      %s120 = scalar_select %p117, %s118, %s119
      %p123 = pneg %p117
      %p124 = scmp.eq.s32.totalorder %s18, 1
      %p125 = por %p123, %p124
      %p126 = scmp.ne.s32.totalorder %s118, %s121
      %p127 = scmp.eq.s32.totalorder %s18, 0
      %p128 = por %p126, %p127
      %p129 = scmp.ne.s32.totalorder %s118, %s121
      %p130 = scmp.eq.s32.totalorder %s23, 1
      %p131 = por %p129, %p130
      %p132 = scmp.ne.s32.totalorder %s121, %s122
      %p133 = scmp.eq.s32.totalorder %s23, 0
      %p134 = por %p132, %p133
      %p135 = scmp.ne.s32.totalorder %s121, %s122
      %p136 = scmp.eq.s32.totalorder %s24, 1
      %p137 = por %p135, %p136
      %p139 = scmp.ne.s32.totalorder %s122, %s138
      %p140 = scmp.eq.s32.totalorder %s24, 0
      %p141 = por %p139, %p140
      %s142 = ssub.s32 %s26, %s33
      %p143 = scmp.eq.s32.totalorder %s142, 0
      %s145 = sadd.s32 %s144, 1
      %s146 = scalar_select %p143, %s144, %s145
      %p149 = pneg %p143
      %p150 = scmp.eq.s32.totalorder %s18, 1
      %p151 = por %p149, %p150
      %p152 = scmp.ne.s32.totalorder %s144, %s147
      %p153 = scmp.eq.s32.totalorder %s18, 0
      %p154 = por %p152, %p153
      %p155 = scmp.ne.s32.totalorder %s144, %s147
      %p156 = scmp.eq.s32.totalorder %s23, 1
      %p157 = por %p155, %p156
      %p158 = scmp.ne.s32.totalorder %s147, %s148
      %p159 = scmp.eq.s32.totalorder %s23, 0
      %p160 = por %p158, %p159
      %p161 = scmp.ne.s32.totalorder %s147, %s148
      %p162 = scmp.eq.s32.totalorder %s24, 1
      %p163 = por %p161, %p162
      %p165 = scmp.ne.s32.totalorder %s148, %s164
      %p166 = scmp.eq.s32.totalorder %s24, 0
      %p167 = por %p165, %p166
      %s168 = ssub.s32 %s26, %s33
      %p169 = scmp.eq.s32.totalorder %s168, 0
      %s171 = sadd.s32 %s170, 1
      %s172 = scalar_select %p169, %s170, %s171
      %p175 = pneg %p169
      %p176 = scmp.eq.s32.totalorder %s18, 1
      %p177 = por %p175, %p176
      %p178 = scmp.ne.s32.totalorder %s170, %s173
      %p179 = scmp.eq.s32.totalorder %s18, 0
      %p180 = por %p178, %p179
      %p181 = scmp.ne.s32.totalorder %s170, %s173
      %p182 = scmp.eq.s32.totalorder %s23, 1
      %p183 = por %p181, %p182
      %p184 = scmp.ne.s32.totalorder %s173, %s174
      %p185 = scmp.eq.s32.totalorder %s23, 0
      %p186 = por %p184, %p185
      %p187 = scmp.ne.s32.totalorder %s173, %s174
      %p188 = scmp.eq.s32.totalorder %s24, 1
      %p189 = por %p187, %p188
      %p191 = scmp.ne.s32.totalorder %s174, %s190
      %p192 = scmp.eq.s32.totalorder %s24, 0
      %p193 = por %p191, %p192
      %s194 = ssub.s32 %s26, %s33
      %p195 = scmp.eq.s32.totalorder %s194, 0
      %s197 = sadd.s32 %s196, 1
      %s198 = scalar_select %p195, %s196, %s197
      %p201 = pneg %p195
      %p202 = scmp.eq.s32.totalorder %s18, 1
      %p203 = por %p201, %p202
      %p204 = scmp.ne.s32.totalorder %s196, %s199
      %p205 = scmp.eq.s32.totalorder %s18, 0
      %p206 = por %p204, %p205
      %p207 = scmp.ne.s32.totalorder %s196, %s199
      %p208 = scmp.eq.s32.totalorder %s23, 1
      %p209 = por %p207, %p208
      %p210 = scmp.ne.s32.totalorder %s199, %s200
      %p211 = scmp.eq.s32.totalorder %s23, 0
      %p212 = por %p210, %p211
      %p213 = scmp.ne.s32.totalorder %s199, %s200
      %p214 = scmp.eq.s32.totalorder %s24, 1
      %p215 = por %p213, %p214
      %p217 = scmp.ne.s32.totalorder %s200, %s216
      %p218 = scmp.eq.s32.totalorder %s24, 0
      %p219 = por %p217, %p218
      %s220 = ssub.s32 %s26, %s33
      %p221 = scmp.eq.s32.totalorder %s220, 0
      %s223 = sadd.s32 %s222, 1
      %s224 = scalar_select %p221, %s222, %s223
      %p227 = pneg %p221
      %p228 = scmp.eq.s32.totalorder %s18, 1
      %p229 = por %p227, %p228
      %p230 = scmp.ne.s32.totalorder %s222, %s225
      %p231 = scmp.eq.s32.totalorder %s18, 0
      %p232 = por %p230, %p231
      %p233 = scmp.ne.s32.totalorder %s222, %s225
      %p234 = scmp.eq.s32.totalorder %s23, 1
      %p235 = por %p233, %p234
      %p236 = scmp.ne.s32.totalorder %s225, %s226
      %p237 = scmp.eq.s32.totalorder %s23, 0
      %p238 = por %p236, %p237
      %p239 = scmp.ne.s32.totalorder %s225, %s226
      %p240 = scmp.eq.s32.totalorder %s24, 1
      %p241 = por %p239, %p240
      %p243 = scmp.ne.s32.totalorder %s226, %s242
      %p244 = scmp.eq.s32.totalorder %s24, 0
      %p245 = por %p243, %p244
      %s246 = ssub.s32 %s25, %s37
      %p247 = scmp.eq.s32.totalorder %s246, 0
      %s249 = sadd.s32 %s248, 1
      %s250 = scalar_select %p247, %s248, %s249
      %p253 = pneg %p247
      %p254 = scmp.eq.s32.totalorder %s18, 1
      %p255 = por %p253, %p254
      %p256 = scmp.ne.s32.totalorder %s248, %s251
      %p257 = scmp.eq.s32.totalorder %s18, 0
      %p258 = por %p256, %p257
      %p259 = scmp.ne.s32.totalorder %s248, %s251
      %p260 = scmp.eq.s32.totalorder %s23, 1
      %p261 = por %p259, %p260
      %p262 = scmp.ne.s32.totalorder %s251, %s252
      %p263 = scmp.eq.s32.totalorder %s23, 0
      %p264 = por %p262, %p263
      %p265 = scmp.ne.s32.totalorder %s251, %s252
      %p266 = scmp.eq.s32.totalorder %s24, 1
      %p267 = por %p265, %p266
      %p269 = scmp.ne.s32.totalorder %s252, %s268
      %p270 = scmp.eq.s32.totalorder %s24, 0
      %p271 = por %p269, %p270
      %p272 = scmp.le.s32.totalorder 1, %s18
      %p273 = scmp.lt.s32.totalorder %s18, 3
      %p274 = pnand %p272, %p273
      %p275 = pneg %p274
      // Predicated region
      $region9: #{tpu_custom_call.1} parent=5 // pred_check
        _
      $region10: #{tpu_custom_call.1} parent=5 // pred_check_branch
        %277 = sbr.rel (%p274) target = $region12
      $region11: #{tpu_custom_call.1} parent=5 // pred_region
        %s278 = ssub.s32 %s18, 1
        // Predicated region
        $region13: #{tpu_custom_call.1} parent=11 // pred_check
          %p279 = pneg %p56
        $region14: #{tpu_custom_call.1} parent=11 // pred_check_branch
          %281 = sbr.rel (%p279) target = $region16
        $region15: #{tpu_custom_call.1} parent=11 // pred_region
          %s282 = smul.u32 2, %s27
          %p283 = scmp.lt.s32.totalorder %s282, 1
          %s284 = scalar_select %p283, %s282, 1
          %s285 = smul.addr %s284, 8
          %s286 = scalar_lea.vmem %s0, %s285
          %s287 = smul.u32 2, %s27
        $region16: #{tpu_custom_call.1} parent=11 // pred_fallthru
          _
      $region12: #{tpu_custom_call.1} parent=5 // pred_fallthru
        _
      %p288 = scmp.lt.s32.totalorder %s18, 2
      // Predicated region
      $region17: #{tpu_custom_call.1} parent=5 // pred_check
        %p289 = pneg %p288
      $region18: #{tpu_custom_call.1} parent=5 // pred_check_branch
        %291 = sbr.rel (%p289) target = $region20
      $region19: #{tpu_custom_call.1} parent=5 // pred_region
        // Predicated region
        $region21: #{tpu_custom_call.1} parent=19 // pred_check
          %p292 = pneg %p76
        $region22: #{tpu_custom_call.1} parent=19 // pred_check_branch
          %294 = sbr.rel (%p292) target = $region24
        $region23: #{tpu_custom_call.1} parent=19 // pred_region
          %p295 = scmp.lt.s32.totalorder %s26, 1
          %s296 = scalar_select %p295, %s26, 1
          %s297 = smul.addr %s296, 4
          %s298 = smul.addr %s297, 4
          %s299 = scalar_lea.vmem %s1, %s298
        $region24: #{tpu_custom_call.1} parent=19 // pred_fallthru
          _
        // Predicated region
        $region25: #{tpu_custom_call.1} parent=19 // pred_check
          %p300 = pneg %p102
        $region26: #{tpu_custom_call.1} parent=19 // pred_check_branch
          %302 = sbr.rel (%p300) target = $region28
        $region27: #{tpu_custom_call.1} parent=19 // pred_region
          %p303 = scmp.lt.s32.totalorder %s26, 1
          %s304 = scalar_select %p303, %s26, 1
          %s305 = scalar_lea.vmem %s2, %s304
        $region28: #{tpu_custom_call.1} parent=19 // pred_fallthru
          _
        // Predicated region
        $region29: #{tpu_custom_call.1} parent=19 // pred_check
          %p306 = pneg %p128
        $region30: #{tpu_custom_call.1} parent=19 // pred_check_branch
          %308 = sbr.rel (%p306) target = $region32
        $region31: #{tpu_custom_call.1} parent=19 // pred_region
          %p309 = scmp.lt.s32.totalorder %s26, 1
          %s310 = scalar_select %p309, %s26, 1
          %s311 = smul.addr %s310, 4
          %s312 = smul.addr %s311, 4
          %s313 = scalar_lea.vmem %s3, %s312
        $region32: #{tpu_custom_call.1} parent=19 // pred_fallthru
          _
        // Predicated region
        $region33: #{tpu_custom_call.1} parent=19 // pred_check
          %p314 = pneg %p154
        $region34: #{tpu_custom_call.1} parent=19 // pred_check_branch
          %316 = sbr.rel (%p314) target = $region36
        $region35: #{tpu_custom_call.1} parent=19 // pred_region
          %p317 = scmp.lt.s32.totalorder %s26, 1
          %s318 = scalar_select %p317, %s26, 1
          %s319 = smul.addr %s318, 4
          %s320 = smul.addr %s319, 4
          %s321 = scalar_lea.vmem %s4, %s320
        $region36: #{tpu_custom_call.1} parent=19 // pred_fallthru
          _
        // Predicated region
        $region37: #{tpu_custom_call.1} parent=19 // pred_check
          %p322 = pneg %p180
        $region38: #{tpu_custom_call.1} parent=19 // pred_check_branch
          %324 = sbr.rel (%p322) target = $region40
        $region39: #{tpu_custom_call.1} parent=19 // pred_region
          %s325 = sand.u32 %s170, 1
          %s326 = scalar_lea.sflag [#allocation3], %s325
          %s327 = sand.u32 %s170, 1
          %s328 = scalar_lea.vmem [#allocation2], %s327
          %s330 = ssub.s32 16, 16
          %331 = vsyncadd %s326, %s330
          %s332 = smul.addr %s26, 16
          %s333 = scalar_lea.hbm %s5, %s332
          %s335 = sshll.u32 %s328, 4
          %s336 = int_to_ptr.vmem [resolvable:$true] %s335
          %338 = dma.hbm_to_vmem [thread:$0]  %s333, 16, %s336, %s326
        $region40: #{tpu_custom_call.1} parent=19 // pred_fallthru
          _
        // Predicated region
        $region41: #{tpu_custom_call.1} parent=19 // pred_check
          %p339 = pneg %p206
        $region42: #{tpu_custom_call.1} parent=19 // pred_check_branch
          %341 = sbr.rel (%p339) target = $region44
        $region43: #{tpu_custom_call.1} parent=19 // pred_region
          %p342 = scmp.lt.s32.totalorder %s26, 1
          %s343 = scalar_select %p342, %s26, 1
          %s344 = smul.addr %s343, 8
          %s345 = smul.addr %s344, 4
          %s346 = scalar_lea.vmem %s6, %s345
        $region44: #{tpu_custom_call.1} parent=19 // pred_fallthru
          _
        // Predicated region
        $region45: #{tpu_custom_call.1} parent=19 // pred_check
          %p347 = pneg %p232
        $region46: #{tpu_custom_call.1} parent=19 // pred_check_branch
          %349 = sbr.rel (%p347) target = $region48
        $region47: #{tpu_custom_call.1} parent=19 // pred_region
          %p350 = scmp.lt.s32.totalorder %s26, 1
          %s351 = scalar_select %p350, %s26, 1
          %s352 = smul.addr %s351, 8
          %s353 = scalar_lea.vmem %s7, %s352
        $region48: #{tpu_custom_call.1} parent=19 // pred_fallthru
          _
      $region20: #{tpu_custom_call.1} parent=5 // pred_fallthru
        _
      %p354 = scmp.le.s32.totalorder 1, %s18
      %p355 = scmp.lt.s32.totalorder %s18, 3
      %p356 = pnand %p354, %p355
      %p357 = pneg %p356
      // Predicated region
      $region49: #{tpu_custom_call.1} parent=5 // pred_check
        _
      $region50: #{tpu_custom_call.1} parent=5 // pred_check_branch
        %359 = sbr.rel (%p356) target = $region52
      $region51: #{tpu_custom_call.1} parent=5 // pred_region
        %s360 = ssub.s32 %s18, 1
        %s361 = sand.u32 %s173, 1
        %s362 = scalar_lea.sflag [#allocation3], %s361
        %s363 = sand.u32 %s173, 1
        %s364 = scalar_lea.vmem [#allocation2], %s363
        // Predicated region
        $region53: #{tpu_custom_call.1} parent=51 // pred_check
          %p365 = pneg %p186
        $region54: #{tpu_custom_call.1} parent=51 // pred_check_branch
          %367 = sbr.rel (%p365) target = $region56
        $region55: #{tpu_custom_call.1} parent=51 // pred_region
          %368 = dma.done %s362, 16
        $region56: #{tpu_custom_call.1} parent=51 // pred_fallthru
          _
        %s369 = smul.u32 2, %s27
        %p370 = scmp.lt.s32.totalorder %s369, 1
        %s371 = scalar_select %p370, %s369, 1
        %s372 = smul.addr %s371, 8
        %s373 = scalar_lea.vmem %s0, %s372
        %p374 = pneg %p56
        %p375 = pneg %p53
        %p376 = scmp.lt.s32.totalorder %s28, 1
        %s377 = scalar_select %p376, %s28, 1
        %s378 = smul.addr %s377, 4
        %s379 = smul.addr %s378, 4
        %s380 = scalar_lea.vmem %s1, %s379
        %p381 = pneg %p82
        %p382 = pneg %p79
        %p383 = scmp.lt.s32.totalorder %s28, 1
        %s384 = scalar_select %p383, %s28, 1
        %s385 = scalar_lea.vmem %s2, %s384
        %p386 = pneg %p108
        %p387 = pneg %p105
        %p388 = scmp.lt.s32.totalorder %s28, 1
        %s389 = scalar_select %p388, %s28, 1
        %s390 = smul.addr %s389, 4
        %s391 = smul.addr %s390, 4
        %s392 = scalar_lea.vmem %s3, %s391
        %p393 = pneg %p134
        %p394 = pneg %p131
        %p395 = scmp.lt.s32.totalorder %s28, 1
        %s396 = scalar_select %p395, %s28, 1
        %s397 = smul.addr %s396, 4
        %s398 = smul.addr %s397, 4
        %s399 = scalar_lea.vmem %s4, %s398
        %p400 = pneg %p160
        %p401 = pneg %p157
        %s402 = sand.u32 %s173, 1
        %s403 = scalar_lea.sflag [#allocation3], %s402
        %s404 = sand.u32 %s173, 1
        %s405 = scalar_lea.vmem [#allocation2], %s404
        %p406 = pneg %p186
        %p407 = pneg %p183
        %p408 = scmp.lt.s32.totalorder %s28, 1
        %s409 = scalar_select %p408, %s28, 1
        %s410 = smul.addr %s409, 8
        %s411 = smul.addr %s410, 4
        %s412 = scalar_lea.vmem %s6, %s411
        %p413 = pneg %p212
        %p414 = pneg %p209
        %p415 = scmp.lt.s32.totalorder %s28, 1
        %s416 = scalar_select %p415, %s28, 1
        %s417 = smul.addr %s416, 8
        %s418 = scalar_lea.vmem %s7, %s417
        %p419 = pneg %p238
        %p420 = pneg %p235
        %p421 = pneg %p264
        %p422 = pneg %p261
        %s423 = smul.u32 2, %s27
        %p424 = scmp.lt.s32.totalorder %s423, 1
        %s425 = scalar_select %p424, %s423, 1
        %s426 = smul.addr %s425, 8
        %s427 = scalar_lea.vmem %s0, %s426
        %s428 = smul.u32 2, %s27
        %p429 = scmp.lt.s32.totalorder %s28, 1
        %s430 = scalar_select %p429, %s28, 1
        %s431 = smul.addr %s430, 4
        %s432 = smul.addr %s431, 4
        %s433 = scalar_lea.vmem %s1, %s432
        %p434 = scmp.lt.s32.totalorder %s28, 1
        %s435 = scalar_select %p434, %s28, 1
        %s436 = scalar_lea.vmem %s2, %s435
        %p437 = scmp.lt.s32.totalorder %s28, 1
        %s438 = scalar_select %p437, %s28, 1
        %s439 = smul.addr %s438, 4
        %s440 = smul.addr %s439, 4
        %s441 = scalar_lea.vmem %s3, %s440
        %p442 = scmp.lt.s32.totalorder %s28, 1
        %s443 = scalar_select %p442, %s28, 1
        %s444 = smul.addr %s443, 4
        %s445 = smul.addr %s444, 4
        %s446 = scalar_lea.vmem %s4, %s445
        %p447 = scmp.lt.s32.totalorder %s28, 1
        %s448 = scalar_select %p447, %s28, 1
        %s449 = smul.addr %s448, 8
        %s450 = smul.addr %s449, 4
        %s451 = scalar_lea.vmem %s6, %s450
        %p452 = scmp.lt.s32.totalorder %s28, 1
        %s453 = scalar_select %p452, %s28, 1
        %s454 = smul.addr %s453, 8
        %s455 = scalar_lea.vmem %s7, %s454
        %s456 = smul.u32 2, %s27
        %p458 = scmp.eq.s32.totalorder %s28, 0
        // Predicated region
        $region57: #{tpu_custom_call.1} parent=51 // pred_check
          %p459 = pneg %p458
        $region58: #{tpu_custom_call.1} parent=51 // pred_check_branch
          %461 = sbr.rel (%p459) target = $region60
        $region59: #{tpu_custom_call.1} parent=51 // pred_region
          %v462 = vld [vmem:[%s427] sm:$0xff]
          %v463 = vld [vmem:[%s427 + $0x8] sm:$0xff]
          %vm464 = vcmask 261120
          %465 = vst.msk [vmem:[#allocation5] sm:$0xff] %vm464, %v462
          %466 = vst.msk [vmem:[#allocation5 + $0x8] sm:$0xff] %vm464, %v463
        $region60: #{tpu_custom_call.1} parent=51 // pred_fallthru
          _
        %v467 = vld [vmem:[#allocation5] sm:$0xff]
        %v468 = vld [vmem:[#allocation5 + $0x8] sm:$0xff]
        %v469 = vpack.c.bf16 %v468, %v467
        %v470 = vld [vmem:[%s433] sm:$0xf]
        %v471 = vld [vmem:[%s433 + $0x4] sm:$0xf]
        %v472 = vld [vmem:[%s433 + $0x8] sm:$0xf]
        %v473 = vld [vmem:[%s433 + $0xc] sm:$0xf]
        %v474 = vld [vmem:[%s436] sm:$0x1]
        %v476 = vlaneseq
        %v477 = vshrl.u32 %v476, 7
        %v478 = vsub.s32 0, %v477
        %v479 = vrot.slane %v474, %v478
        %v485 = vunpack.c.l.b16 %v470
        %v486 = vunpack.c.l.b16 %v471
        %v487 = vunpack.c.l.b16 %v472
        %v488 = vunpack.c.l.b16 %v473
        %v489 = vpack.c.b16 %v486, %v485
        %v490 = vpack.c.b16 %v488, %v487
        %vm493 = vcmask 261120
        %v495 = vsel %vm493, %v469, 0
        %497 = vmatprep.subr.bf16.mxu0 0
        %498 = vmatpush1.bf16.msra.mxu0 %v489
        %499 = vmatprep.subr.bf16.mxu0 0
        %500 = vmatpush1.bf16.msra.mxu0 %v490
        %501 = vmatprep.subr.bf16.mxu0 0
        %502 = vmatpush1.bf16.msra.mxu0 0
        %503 = vmatprep.subr.bf16.mxu0 0
        %504 = vmatpush1.bf16.msra.mxu0 0
        %505 = vmatprep.subr.bf16.mxu0 0
        %506 = vmatpush1.bf16.msra.mxu0 0
        %507 = vmatprep.subr.bf16.mxu0 0
        %508 = vmatpush1.bf16.msra.mxu0 0
        %509 = vmatprep.subr.bf16.mxu0 0
        %510 = vmatpush1.bf16.msra.mxu0 0
        %511 = vmatprep.subr.bf16.mxu0 0
        %512 = vmatpush1.bf16.msra.mxu0 0
        %513 = vmatprep.subr.bf16.mxu0 0
        %514 = vmatpush1.bf16.msra.mxu0 0
        %515 = vmatprep.subr.bf16.mxu0 0
        %516 = vmatpush1.bf16.msra.mxu0 0
        %517 = vmatprep.subr.bf16.mxu0 0
        %518 = vmatpush1.bf16.msra.mxu0 0
        %519 = vmatprep.subr.bf16.mxu0 0
        %520 = vmatpush1.bf16.msra.mxu0 0
        %521 = vmatprep.subr.bf16.mxu0 0
        %522 = vmatpush1.bf16.msra.mxu0 0
        %523 = vmatprep.subr.bf16.mxu0 0
        %524 = vmatpush1.bf16.msra.mxu0 0
        %525 = vmatprep.subr.bf16.mxu0 0
        %526 = vmatpush1.bf16.msra.mxu0 0
        %527 = vmatprep.subr.bf16.mxu0 0
        %528 = vmatpush1.bf16.msra.mxu0 0
        %529 = vmatprep.mubr.bf16.mxu0 0
        %530 = vmatmul.mubr.bf16.gmra.mrb[0].mxu0 %v495
        %v531 = vpop.f32.mrb[0].mxu0
        %v532 = vadd.f32 %v479, %v531
        %v533 = vpop.f32.mrb[0].mxu0
        %v534 = vpop.f32.mrb[0].mxu0
        %v535 = vadd.f32 %v479, %v534
        %v536 = vpop.f32.mrb[0].mxu0
        %537 = vdwg.mxu0
        %v538 = vpack.c.bf16 %v532, %v532
        %v539 = vpack.c.bf16 %v535, %v535
        %541 = vrot.lane.b32.xlu0 %v538, 96
        %v542 = vpop.permute.xlu0 %541
        %vm543 = vcmask 64512
        %v545 = vsel %vm543, %v538, 0
        %v548 = vsel %vm543, %v542, 0
        %550 = vmatprep.subr.bf16.mxu0 0
        %551 = vmatpush1.bf16.xpose.msra.mxu0 %v548
        %552 = vmatprep.subr.bf16.mxu0 0
        %553 = vmatpush1.bf16.xpose.msra.mxu0 0
        %554 = vmatprep.subr.bf16.mxu0 0
        %555 = vmatpush1.bf16.xpose.msra.mxu0 0
        %556 = vmatprep.subr.bf16.mxu0 0
        %557 = vmatpush1.bf16.xpose.msra.mxu0 0
        %558 = vmatprep.subr.bf16.mxu0 0
        %559 = vmatpush1.bf16.xpose.msra.mxu0 0
        %560 = vmatprep.subr.bf16.mxu0 0
        %561 = vmatpush1.bf16.xpose.msra.mxu0 0
        %562 = vmatprep.subr.bf16.mxu0 0
        %563 = vmatpush1.bf16.xpose.msra.mxu0 0
        %564 = vmatprep.subr.bf16.mxu0 0
        %565 = vmatpush1.bf16.xpose.msra.mxu0 0
        %566 = vmatprep.subr.bf16.mxu0 0
        %567 = vmatpush1.bf16.xpose.msra.mxu0 0
        %568 = vmatprep.subr.bf16.mxu0 0
        %569 = vmatpush1.bf16.xpose.msra.mxu0 0
        %570 = vmatprep.subr.bf16.mxu0 0
        %571 = vmatpush1.bf16.xpose.msra.mxu0 0
        %572 = vmatprep.subr.bf16.mxu0 0
        %573 = vmatpush1.bf16.xpose.msra.mxu0 0
        %574 = vmatprep.subr.bf16.mxu0 0
        %575 = vmatpush1.bf16.xpose.msra.mxu0 0
        %576 = vmatprep.subr.bf16.mxu0 0
        %577 = vmatpush1.bf16.xpose.msra.mxu0 0
        %578 = vmatprep.subr.bf16.mxu0 0
        %579 = vmatpush1.bf16.xpose.msra.mxu0 0
        %580 = vmatprep.subr.bf16.mxu0 0
        %581 = vmatpush1.bf16.xpose.msra.mxu0 0
        %582 = vmatprep.mubr.bf16.mxu0 0
        %583 = vmatmul.mubr.bf16.gmra.mrb[0].mxu0 %v545
        %v584 = vpop.f32.mrb[0].mxu0
        %v585 = vadd.f32 0.0, %v584
        %v586 = vpop.f32.mrb[0].mxu0
        %v587 = vpop.f32.mrb[0].mxu0
        %v588 = vpop.f32.mrb[0].mxu0
        %589 = vdwg.mxu0
        %591 = vrot.lane.b32.xlu0 %v539, 96
        %v592 = vpop.permute.xlu0 %591
        %v594 = vsel %vm543, %v539, 0
        %v597 = vsel %vm543, %v592, 0
        %599 = vmatprep.subr.bf16.mxu0 0
        %600 = vmatpush1.bf16.xpose.msra.mxu0 %v597
        %601 = vmatprep.subr.bf16.mxu0 0
        %602 = vmatpush1.bf16.xpose.msra.mxu0 0
        %603 = vmatprep.subr.bf16.mxu0 0
        %604 = vmatpush1.bf16.xpose.msra.mxu0 0
        %605 = vmatprep.subr.bf16.mxu0 0
        %606 = vmatpush1.bf16.xpose.msra.mxu0 0
        %607 = vmatprep.subr.bf16.mxu0 0
        %608 = vmatpush1.bf16.xpose.msra.mxu0 0
        %609 = vmatprep.subr.bf16.mxu0 0
        %610 = vmatpush1.bf16.xpose.msra.mxu0 0
        %611 = vmatprep.subr.bf16.mxu0 0
        %612 = vmatpush1.bf16.xpose.msra.mxu0 0
        %613 = vmatprep.subr.bf16.mxu0 0
        %614 = vmatpush1.bf16.xpose.msra.mxu0 0
        %615 = vmatprep.subr.bf16.mxu0 0
        %616 = vmatpush1.bf16.xpose.msra.mxu0 0
        %617 = vmatprep.subr.bf16.mxu0 0
        %618 = vmatpush1.bf16.xpose.msra.mxu0 0
        %619 = vmatprep.subr.bf16.mxu0 0
        %620 = vmatpush1.bf16.xpose.msra.mxu0 0
        %621 = vmatprep.subr.bf16.mxu0 0
        %622 = vmatpush1.bf16.xpose.msra.mxu0 0
        %623 = vmatprep.subr.bf16.mxu0 0
        %624 = vmatpush1.bf16.xpose.msra.mxu0 0
        %625 = vmatprep.subr.bf16.mxu0 0
        %626 = vmatpush1.bf16.xpose.msra.mxu0 0
        %627 = vmatprep.subr.bf16.mxu0 0
        %628 = vmatpush1.bf16.xpose.msra.mxu0 0
        %629 = vmatprep.subr.bf16.mxu0 0
        %630 = vmatpush1.bf16.xpose.msra.mxu0 0
        %631 = vmatprep.mubr.bf16.mxu0 0
        %632 = vmatmul.mubr.bf16.gmra.mrb[0].mxu0 %v594
        %v633 = vpop.f32.mrb[0].mxu0
        %v634 = vadd.f32 0.0, %v633
        %v635 = vpop.f32.mrb[0].mxu0
        %v636 = vpop.f32.mrb[0].mxu0
        %v637 = vpop.f32.mrb[0].mxu0
        %638 = vdwg.mxu0
        %v639 = vsel %vm543, %v585, -inf
        %640 = vmax.xlane.f32.xlu0 %v639
        %v641 = vpop.xlane.xlu0 %640
        %v642 = vsel %vm543, %v634, -inf
        %643 = vmax.xlane.f32.xlu0 %v642
        %v644 = vpop.xlane.xlu0 %643
        %v645 = vsub.f32 %v585, %v641
        %v646 = vsub.f32 %v634, %v644
        %v647 = vmul.f32 %v645, 1.442695
        %v648 = vpow.pop %v647
        %v649 = vmul.f32 %v646, 1.442695
        %v650 = vpow.pop %v649
        %v651 = vsel %vm543, %v648, 0.0
        %652 = vadd.xlane.f32.xlu0 %v651
        %v653 = vpop.xlane.xlu0 %652
        %v654 = vsel %vm543, %v650, 0.0
        %655 = vadd.xlane.f32.xlu0 %v654
        %v656 = vpop.xlane.xlu0 %655
        %v657 = vrcp.pop %v653
        %v658 = vrcp.pop %v656
        %v659 = vpack.c.bf16 %v648, %v648
        %v660 = vpack.c.bf16 %v650, %v650
        %661 = vrot.lane.b32.xlu0 %v538, 64
        %v662 = vpop.permute.xlu0 %661
        %v664 = vsel %vm543, %v659, 0
        %vm666 = vcmask 1043456
        %v668 = vsel %vm666, %v662, 0
        %670 = vmatprep.subr.bf16.mxu0 0
        %671 = vmatpush1.bf16.msra.mxu0 %v668
        %672 = vmatprep.subr.bf16.mxu0 0
        %673 = vmatpush1.bf16.msra.mxu0 0
        %674 = vmatprep.subr.bf16.mxu0 0
        %675 = vmatpush1.bf16.msra.mxu0 0
        %676 = vmatprep.subr.bf16.mxu0 0
        %677 = vmatpush1.bf16.msra.mxu0 0
        %678 = vmatprep.subr.bf16.mxu0 0
        %679 = vmatpush1.bf16.msra.mxu0 0
        %680 = vmatprep.subr.bf16.mxu0 0
        %681 = vmatpush1.bf16.msra.mxu0 0
        %682 = vmatprep.subr.bf16.mxu0 0
        %683 = vmatpush1.bf16.msra.mxu0 0
        %684 = vmatprep.subr.bf16.mxu0 0
        %685 = vmatpush1.bf16.msra.mxu0 0
        %686 = vmatprep.subr.bf16.mxu0 0
        %687 = vmatpush1.bf16.msra.mxu0 0
        %688 = vmatprep.subr.bf16.mxu0 0
        %689 = vmatpush1.bf16.msra.mxu0 0
        %690 = vmatprep.subr.bf16.mxu0 0
        %691 = vmatpush1.bf16.msra.mxu0 0
        %692 = vmatprep.subr.bf16.mxu0 0
        %693 = vmatpush1.bf16.msra.mxu0 0
        %694 = vmatprep.subr.bf16.mxu0 0
        %695 = vmatpush1.bf16.msra.mxu0 0
        %696 = vmatprep.subr.bf16.mxu0 0
        %697 = vmatpush1.bf16.msra.mxu0 0
        %698 = vmatprep.subr.bf16.mxu0 0
        %699 = vmatpush1.bf16.msra.mxu0 0
        %700 = vmatprep.subr.bf16.mxu0 0
        %701 = vmatpush1.bf16.msra.mxu0 0
        %702 = vmatprep.mubr.bf16.mxu0 0
        %703 = vmatmul.mubr.bf16.gmra.mrb[0].mxu0 %v664
        %v704 = vpop.f32.mrb[0].mxu0
        %v705 = vadd.f32 0.0, %v704
        %v706 = vpop.f32.mrb[0].mxu0
        %v707 = vpop.f32.mrb[0].mxu0
        %v708 = vpop.f32.mrb[0].mxu0
        %709 = vdwg.mxu0
        %710 = vrot.lane.b32.xlu0 %v539, 64
        %v711 = vpop.permute.xlu0 %710
        %v713 = vsel %vm543, %v660, 0
        %v716 = vsel %vm666, %v711, 0
        %718 = vmatprep.subr.bf16.mxu0 0
        %719 = vmatpush1.bf16.msra.mxu0 %v716
        %720 = vmatprep.subr.bf16.mxu0 0
        %721 = vmatpush1.bf16.msra.mxu0 0
        %722 = vmatprep.subr.bf16.mxu0 0
        %723 = vmatpush1.bf16.msra.mxu0 0
        %724 = vmatprep.subr.bf16.mxu0 0
        %725 = vmatpush1.bf16.msra.mxu0 0
        %726 = vmatprep.subr.bf16.mxu0 0
        %727 = vmatpush1.bf16.msra.mxu0 0
        %728 = vmatprep.subr.bf16.mxu0 0
        %729 = vmatpush1.bf16.msra.mxu0 0
        %730 = vmatprep.subr.bf16.mxu0 0
        %731 = vmatpush1.bf16.msra.mxu0 0
        %732 = vmatprep.subr.bf16.mxu0 0
        %733 = vmatpush1.bf16.msra.mxu0 0
        %734 = vmatprep.subr.bf16.mxu0 0
        %735 = vmatpush1.bf16.msra.mxu0 0
        %736 = vmatprep.subr.bf16.mxu0 0
        %737 = vmatpush1.bf16.msra.mxu0 0
        %738 = vmatprep.subr.bf16.mxu0 0
        %739 = vmatpush1.bf16.msra.mxu0 0
        %740 = vmatprep.subr.bf16.mxu0 0
        %741 = vmatpush1.bf16.msra.mxu0 0
        %742 = vmatprep.subr.bf16.mxu0 0
        %743 = vmatpush1.bf16.msra.mxu0 0
        %744 = vmatprep.subr.bf16.mxu0 0
        %745 = vmatpush1.bf16.msra.mxu0 0
        %746 = vmatprep.subr.bf16.mxu0 0
        %747 = vmatpush1.bf16.msra.mxu0 0
        %748 = vmatprep.subr.bf16.mxu0 0
        %749 = vmatpush1.bf16.msra.mxu0 0
        %750 = vmatprep.mubr.bf16.mxu0 0
        %751 = vmatmul.mubr.bf16.gmra.mrb[0].mxu0 %v713
        %v752 = vpop.f32.mrb[0].mxu0
        %v753 = vadd.f32 0.0, %v752
        %v754 = vpop.f32.mrb[0].mxu0
        %v755 = vpop.f32.mrb[0].mxu0
        %v756 = vpop.f32.mrb[0].mxu0
        %757 = vdwg.mxu0
        %v758 = vmul.f32 %v705, %v657
        %v759 = vmul.f32 %v753, %v658
        %760 = vrot.lane.b32.xlu0 %v538, 120
        %v761 = vpop.permute.xlu0 %760
        %762 = vrot.lane.b32.xlu0 %v538, 88
        %v763 = vpop.permute.xlu0 %762
        %v765 = vsel %vm543, %v761, 0
        %v768 = vsel %vm543, %v763, 0
        %770 = vmatprep.subr.bf16.mxu0 0
        %771 = vmatpush1.bf16.xpose.msra.mxu0 %v768
        %772 = vmatprep.subr.bf16.mxu0 0
        %773 = vmatpush1.bf16.xpose.msra.mxu0 0
        %774 = vmatprep.subr.bf16.mxu0 0
        %775 = vmatpush1.bf16.xpose.msra.mxu0 0
        %776 = vmatprep.subr.bf16.mxu0 0
        %777 = vmatpush1.bf16.xpose.msra.mxu0 0
        %778 = vmatprep.subr.bf16.mxu0 0
        %779 = vmatpush1.bf16.xpose.msra.mxu0 0
        %780 = vmatprep.subr.bf16.mxu0 0
        %781 = vmatpush1.bf16.xpose.msra.mxu0 0
        %782 = vmatprep.subr.bf16.mxu0 0
        %783 = vmatpush1.bf16.xpose.msra.mxu0 0
        %784 = vmatprep.subr.bf16.mxu0 0
        %785 = vmatpush1.bf16.xpose.msra.mxu0 0
        %786 = vmatprep.subr.bf16.mxu0 0
        %787 = vmatpush1.bf16.xpose.msra.mxu0 0
        %788 = vmatprep.subr.bf16.mxu0 0
        %789 = vmatpush1.bf16.xpose.msra.mxu0 0
        %790 = vmatprep.subr.bf16.mxu0 0
        %791 = vmatpush1.bf16.xpose.msra.mxu0 0
        %792 = vmatprep.subr.bf16.mxu0 0
        %793 = vmatpush1.bf16.xpose.msra.mxu0 0
        %794 = vmatprep.subr.bf16.mxu0 0
        %795 = vmatpush1.bf16.xpose.msra.mxu0 0
        %796 = vmatprep.subr.bf16.mxu0 0
        %797 = vmatpush1.bf16.xpose.msra.mxu0 0
        %798 = vmatprep.subr.bf16.mxu0 0
        %799 = vmatpush1.bf16.xpose.msra.mxu0 0
        %800 = vmatprep.subr.bf16.mxu0 0
        %801 = vmatpush1.bf16.xpose.msra.mxu0 0
        %802 = vmatprep.mubr.bf16.mxu0 0
        %803 = vmatmul.mubr.bf16.gmra.mrb[0].mxu0 %v765
        %v804 = vpop.f32.mrb[0].mxu0
        %v805 = vadd.f32 0.0, %v804
        %v806 = vpop.f32.mrb[0].mxu0
        %v807 = vpop.f32.mrb[0].mxu0
        %v808 = vpop.f32.mrb[0].mxu0
        %809 = vdwg.mxu0
        %810 = vrot.lane.b32.xlu0 %v539, 120
        %v811 = vpop.permute.xlu0 %810
        %812 = vrot.lane.b32.xlu0 %v539, 88
        %v813 = vpop.permute.xlu0 %812
        %v815 = vsel %vm543, %v811, 0
        %v818 = vsel %vm543, %v813, 0
        %820 = vmatprep.subr.bf16.mxu0 0
        %821 = vmatpush1.bf16.xpose.msra.mxu0 %v818
        %822 = vmatprep.subr.bf16.mxu0 0
        %823 = vmatpush1.bf16.xpose.msra.mxu0 0
        %824 = vmatprep.subr.bf16.mxu0 0
        %825 = vmatpush1.bf16.xpose.msra.mxu0 0
        %826 = vmatprep.subr.bf16.mxu0 0
        %827 = vmatpush1.bf16.xpose.msra.mxu0 0
        %828 = vmatprep.subr.bf16.mxu0 0
        %829 = vmatpush1.bf16.xpose.msra.mxu0 0
        %830 = vmatprep.subr.bf16.mxu0 0
        %831 = vmatpush1.bf16.xpose.msra.mxu0 0
        %832 = vmatprep.subr.bf16.mxu0 0
        %833 = vmatpush1.bf16.xpose.msra.mxu0 0
        %834 = vmatprep.subr.bf16.mxu0 0
        %835 = vmatpush1.bf16.xpose.msra.mxu0 0
        %836 = vmatprep.subr.bf16.mxu0 0
        %837 = vmatpush1.bf16.xpose.msra.mxu0 0
        %838 = vmatprep.subr.bf16.mxu0 0
        %839 = vmatpush1.bf16.xpose.msra.mxu0 0
        %840 = vmatprep.subr.bf16.mxu0 0
        %841 = vmatpush1.bf16.xpose.msra.mxu0 0
        %842 = vmatprep.subr.bf16.mxu0 0
        %843 = vmatpush1.bf16.xpose.msra.mxu0 0
        %844 = vmatprep.subr.bf16.mxu0 0
        %845 = vmatpush1.bf16.xpose.msra.mxu0 0
        %846 = vmatprep.subr.bf16.mxu0 0
        %847 = vmatpush1.bf16.xpose.msra.mxu0 0
        %848 = vmatprep.subr.bf16.mxu0 0
        %849 = vmatpush1.bf16.xpose.msra.mxu0 0
        %850 = vmatprep.subr.bf16.mxu0 0
        %851 = vmatpush1.bf16.xpose.msra.mxu0 0
        %852 = vmatprep.mubr.bf16.mxu0 0
        %853 = vmatmul.mubr.bf16.gmra.mrb[0].mxu0 %v815
        %v854 = vpop.f32.mrb[0].mxu0
        %v855 = vadd.f32 0.0, %v854
        %v856 = vpop.f32.mrb[0].mxu0
        %v857 = vpop.f32.mrb[0].mxu0
        %v858 = vpop.f32.mrb[0].mxu0
        %859 = vdwg.mxu0
        %v860 = vsel %vm543, %v805, -inf
        %861 = vmax.xlane.f32.xlu0 %v860
        %v862 = vpop.xlane.xlu0 %861
        %v863 = vsel %vm543, %v855, -inf
        %864 = vmax.xlane.f32.xlu0 %v863
        %v865 = vpop.xlane.xlu0 %864
        %v866 = vsub.f32 %v805, %v862
        %v867 = vsub.f32 %v855, %v865
        %v868 = vmul.f32 %v866, 1.442695
        %v869 = vpow.pop %v868
        %v870 = vmul.f32 %v867, 1.442695
        %v871 = vpow.pop %v870
        %v872 = vsel %vm543, %v869, 0.0
        %873 = vadd.xlane.f32.xlu0 %v872
        %v874 = vpop.xlane.xlu0 %873
        %v875 = vsel %vm543, %v871, 0.0
        %876 = vadd.xlane.f32.xlu0 %v875
        %v877 = vpop.xlane.xlu0 %876
        %v878 = vrcp.pop %v874
        %v879 = vrcp.pop %v877
        %v880 = vpack.c.bf16 %v869, %v869
        %v881 = vpack.c.bf16 %v871, %v871
        %882 = vrot.lane.b32.xlu0 %v538, 56
        %v883 = vpop.permute.xlu0 %882
        %v885 = vsel %vm543, %v880, 0
        %v888 = vsel %vm666, %v883, 0
        %890 = vmatprep.subr.bf16.mxu0 0
        %891 = vmatpush1.bf16.msra.mxu0 %v888
        %892 = vmatprep.subr.bf16.mxu0 0
        %893 = vmatpush1.bf16.msra.mxu0 0
        %894 = vmatprep.subr.bf16.mxu0 0
        %895 = vmatpush1.bf16.msra.mxu0 0
        %896 = vmatprep.subr.bf16.mxu0 0
        %897 = vmatpush1.bf16.msra.mxu0 0
        %898 = vmatprep.subr.bf16.mxu0 0
        %899 = vmatpush1.bf16.msra.mxu0 0
        %900 = vmatprep.subr.bf16.mxu0 0
        %901 = vmatpush1.bf16.msra.mxu0 0
        %902 = vmatprep.subr.bf16.mxu0 0
        %903 = vmatpush1.bf16.msra.mxu0 0
        %904 = vmatprep.subr.bf16.mxu0 0
        %905 = vmatpush1.bf16.msra.mxu0 0
        %906 = vmatprep.subr.bf16.mxu0 0
        %907 = vmatpush1.bf16.msra.mxu0 0
        %908 = vmatprep.subr.bf16.mxu0 0
        %909 = vmatpush1.bf16.msra.mxu0 0
        %910 = vmatprep.subr.bf16.mxu0 0
        %911 = vmatpush1.bf16.msra.mxu0 0
        %912 = vmatprep.subr.bf16.mxu0 0
        %913 = vmatpush1.bf16.msra.mxu0 0
        %914 = vmatprep.subr.bf16.mxu0 0
        %915 = vmatpush1.bf16.msra.mxu0 0
        %916 = vmatprep.subr.bf16.mxu0 0
        %917 = vmatpush1.bf16.msra.mxu0 0
        %918 = vmatprep.subr.bf16.mxu0 0
        %919 = vmatpush1.bf16.msra.mxu0 0
        %920 = vmatprep.subr.bf16.mxu0 0
        %921 = vmatpush1.bf16.msra.mxu0 0
        %922 = vmatprep.mubr.bf16.mxu0 0
        %923 = vmatmul.mubr.bf16.gmra.mrb[0].mxu0 %v885
        %v924 = vpop.f32.mrb[0].mxu0
        %v925 = vadd.f32 0.0, %v924
        %v926 = vpop.f32.mrb[0].mxu0
        %v927 = vpop.f32.mrb[0].mxu0
        %v928 = vpop.f32.mrb[0].mxu0
        %929 = vdwg.mxu0
        %930 = vrot.lane.b32.xlu0 %v539, 56
        %v931 = vpop.permute.xlu0 %930
        %v933 = vsel %vm543, %v881, 0
        %v936 = vsel %vm666, %v931, 0
        %938 = vmatprep.subr.bf16.mxu0 0
        %939 = vmatpush1.bf16.msra.mxu0 %v936
        %940 = vmatprep.subr.bf16.mxu0 0
        %941 = vmatpush1.bf16.msra.mxu0 0
        %942 = vmatprep.subr.bf16.mxu0 0
        %943 = vmatpush1.bf16.msra.mxu0 0
        %944 = vmatprep.subr.bf16.mxu0 0
        %945 = vmatpush1.bf16.msra.mxu0 0
        %946 = vmatprep.subr.bf16.mxu0 0
        %947 = vmatpush1.bf16.msra.mxu0 0
        %948 = vmatprep.subr.bf16.mxu0 0
        %949 = vmatpush1.bf16.msra.mxu0 0
        %950 = vmatprep.subr.bf16.mxu0 0
        %951 = vmatpush1.bf16.msra.mxu0 0
        %952 = vmatprep.subr.bf16.mxu0 0
        %953 = vmatpush1.bf16.msra.mxu0 0
        %954 = vmatprep.subr.bf16.mxu0 0
        %955 = vmatpush1.bf16.msra.mxu0 0
        %956 = vmatprep.subr.bf16.mxu0 0
        %957 = vmatpush1.bf16.msra.mxu0 0
        %958 = vmatprep.subr.bf16.mxu0 0
        %959 = vmatpush1.bf16.msra.mxu0 0
        %960 = vmatprep.subr.bf16.mxu0 0
        %961 = vmatpush1.bf16.msra.mxu0 0
        %962 = vmatprep.subr.bf16.mxu0 0
        %963 = vmatpush1.bf16.msra.mxu0 0
        %964 = vmatprep.subr.bf16.mxu0 0
        %965 = vmatpush1.bf16.msra.mxu0 0
        %966 = vmatprep.subr.bf16.mxu0 0
        %967 = vmatpush1.bf16.msra.mxu0 0
        %968 = vmatprep.subr.bf16.mxu0 0
        %969 = vmatpush1.bf16.msra.mxu0 0
        %970 = vmatprep.mubr.bf16.mxu0 0
        %971 = vmatmul.mubr.bf16.gmra.mrb[0].mxu0 %v933
        %v972 = vpop.f32.mrb[0].mxu0
        %v973 = vadd.f32 0.0, %v972
        %v974 = vpop.f32.mrb[0].mxu0
        %v975 = vpop.f32.mrb[0].mxu0
        %v976 = vpop.f32.mrb[0].mxu0
        %977 = vdwg.mxu0
        %v978 = vmul.f32 %v925, %v878
        %v979 = vmul.f32 %v973, %v879
        %980 = vrot.lane.b32.xlu0 %v538, 112
        %v981 = vpop.permute.xlu0 %980
        %982 = vrot.lane.b32.xlu0 %v538, 80
        %v983 = vpop.permute.xlu0 %982
        %v985 = vsel %vm543, %v981, 0
        %v988 = vsel %vm543, %v983, 0
        %990 = vmatprep.subr.bf16.mxu0 0
        %991 = vmatpush1.bf16.xpose.msra.mxu0 %v988
        %992 = vmatprep.subr.bf16.mxu0 0
        %993 = vmatpush1.bf16.xpose.msra.mxu0 0
        %994 = vmatprep.subr.bf16.mxu0 0
        %995 = vmatpush1.bf16.xpose.msra.mxu0 0
        %996 = vmatprep.subr.bf16.mxu0 0
        %997 = vmatpush1.bf16.xpose.msra.mxu0 0
        %998 = vmatprep.subr.bf16.mxu0 0
        %999 = vmatpush1.bf16.xpose.msra.mxu0 0
        %1000 = vmatprep.subr.bf16.mxu0 0
        %1001 = vmatpush1.bf16.xpose.msra.mxu0 0
        %1002 = vmatprep.subr.bf16.mxu0 0
        %1003 = vmatpush1.bf16.xpose.msra.mxu0 0
        %1004 = vmatprep.subr.bf16.mxu0 0
        %1005 = vmatpush1.bf16.xpose.msra.mxu0 0
        %1006 = vmatprep.subr.bf16.mxu0 0
        %1007 = vmatpush1.bf16.xpose.msra.mxu0 0
        %1008 = vmatprep.subr.bf16.mxu0 0
        %1009 = vmatpush1.bf16.xpose.msra.mxu0 0
        %1010 = vmatprep.subr.bf16.mxu0 0
        %1011 = vmatpush1.bf16.xpose.msra.mxu0 0
        %1012 = vmatprep.subr.bf16.mxu0 0
        %1013 = vmatpush1.bf16.xpose.msra.mxu0 0
        %1014 = vmatprep.subr.bf16.mxu0 0
        %1015 = vmatpush1.bf16.xpose.msra.mxu0 0
        %1016 = vmatprep.subr.bf16.mxu0 0
        %1017 = vmatpush1.bf16.xpose.msra.mxu0 0
        %1018 = vmatprep.subr.bf16.mxu0 0
        %1019 = vmatpush1.bf16.xpose.msra.mxu0 0
        %1020 = vmatprep.subr.bf16.mxu0 0
        %1021 = vmatpush1.bf16.xpose.msra.mxu0 0
        %1022 = vmatprep.mubr.bf16.mxu0 0
        %1023 = vmatmul.mubr.bf16.gmra.mrb[0].mxu0 %v985
        %v1024 = vpop.f32.mrb[0].mxu0
        %v1025 = vadd.f32 0.0, %v1024
        %v1026 = vpop.f32.mrb[0].mxu0
        %v1027 = vpop.f32.mrb[0].mxu0
        %v1028 = vpop.f32.mrb[0].mxu0
        %1029 = vdwg.mxu0
        %1030 = vrot.lane.b32.xlu0 %v539, 112
        %v1031 = vpop.permute.xlu0 %1030
        %1032 = vrot.lane.b32.xlu0 %v539, 80
        %v1033 = vpop.permute.xlu0 %1032
        %v1035 = vsel %vm543, %v1031, 0
        %v1038 = vsel %vm543, %v1033, 0
        %1040 = vmatprep.subr.bf16.mxu0 0
        %1041 = vmatpush1.bf16.xpose.msra.mxu0 %v1038
        %1042 = vmatprep.subr.bf16.mxu0 0
        %1043 = vmatpush1.bf16.xpose.msra.mxu0 0
        %1044 = vmatprep.subr.bf16.mxu0 0
        %1045 = vmatpush1.bf16.xpose.msra.mxu0 0
        %1046 = vmatprep.subr.bf16.mxu0 0
        %1047 = vmatpush1.bf16.xpose.msra.mxu0 0
        %1048 = vmatprep.subr.bf16.mxu0 0
        %1049 = vmatpush1.bf16.xpose.msra.mxu0 0
        %1050 = vmatprep.subr.bf16.mxu0 0
        %1051 = vmatpush1.bf16.xpose.msra.mxu0 0
        %1052 = vmatprep.subr.bf16.mxu0 0
        %1053 = vmatpush1.bf16.xpose.msra.mxu0 0
        %1054 = vmatprep.subr.bf16.mxu0 0
        %1055 = vmatpush1.bf16.xpose.msra.mxu0 0
        %1056 = vmatprep.subr.bf16.mxu0 0
        %1057 = vmatpush1.bf16.xpose.msra.mxu0 0
        %1058 = vmatprep.subr.bf16.mxu0 0
        %1059 = vmatpush1.bf16.xpose.msra.mxu0 0
        %1060 = vmatprep.subr.bf16.mxu0 0
        %1061 = vmatpush1.bf16.xpose.msra.mxu0 0
        %1062 = vmatprep.subr.bf16.mxu0 0
        %1063 = vmatpush1.bf16.xpose.msra.mxu0 0
        %1064 = vmatprep.subr.bf16.mxu0 0
        %1065 = vmatpush1.bf16.xpose.msra.mxu0 0
        %1066 = vmatprep.subr.bf16.mxu0 0
        %1067 = vmatpush1.bf16.xpose.msra.mxu0 0
        %1068 = vmatprep.subr.bf16.mxu0 0
        %1069 = vmatpush1.bf16.xpose.msra.mxu0 0
        %1070 = vmatprep.subr.bf16.mxu0 0
        %1071 = vmatpush1.bf16.xpose.msra.mxu0 0
        %1072 = vmatprep.mubr.bf16.mxu0 0
        %1073 = vmatmul.mubr.bf16.gmra.mrb[0].mxu0 %v1035
        %v1074 = vpop.f32.mrb[0].mxu0
        %v1075 = vadd.f32 0.0, %v1074
        %v1076 = vpop.f32.mrb[0].mxu0
        %v1077 = vpop.f32.mrb[0].mxu0
        %v1078 = vpop.f32.mrb[0].mxu0
        %1079 = vdwg.mxu0
        %v1080 = vsel %vm543, %v1025, -inf
        %1081 = vmax.xlane.f32.xlu0 %v1080
        %v1082 = vpop.xlane.xlu0 %1081
        %v1083 = vsel %vm543, %v1075, -inf
        %1084 = vmax.xlane.f32.xlu0 %v1083
        %v1085 = vpop.xlane.xlu0 %1084
        %v1086 = vsub.f32 %v1025, %v1082
        %v1087 = vsub.f32 %v1075, %v1085
        %v1088 = vmul.f32 %v1086, 1.442695
        %v1089 = vpow.pop %v1088
        %v1090 = vmul.f32 %v1087, 1.442695
        %v1091 = vpow.pop %v1090
        %v1092 = vsel %vm543, %v1089, 0.0
        %1093 = vadd.xlane.f32.xlu0 %v1092
        %v1094 = vpop.xlane.xlu0 %1093
        %v1095 = vsel %vm543, %v1091, 0.0
        %1096 = vadd.xlane.f32.xlu0 %v1095
        %v1097 = vpop.xlane.xlu0 %1096
        %v1098 = vrcp.pop %v1094
        %v1099 = vrcp.pop %v1097
        %v1100 = vpack.c.bf16 %v1089, %v1089
        %v1101 = vpack.c.bf16 %v1091, %v1091
        %1102 = vrot.lane.b32.xlu0 %v538, 48
        %v1103 = vpop.permute.xlu0 %1102
        %v1105 = vsel %vm543, %v1100, 0
        %v1108 = vsel %vm666, %v1103, 0
        %1110 = vmatprep.subr.bf16.mxu0 0
        %1111 = vmatpush1.bf16.msra.mxu0 %v1108
        %1112 = vmatprep.subr.bf16.mxu0 0
        %1113 = vmatpush1.bf16.msra.mxu0 0
        %1114 = vmatprep.subr.bf16.mxu0 0
        %1115 = vmatpush1.bf16.msra.mxu0 0
        %1116 = vmatprep.subr.bf16.mxu0 0
        %1117 = vmatpush1.bf16.msra.mxu0 0
        %1118 = vmatprep.subr.bf16.mxu0 0
        %1119 = vmatpush1.bf16.msra.mxu0 0
        %1120 = vmatprep.subr.bf16.mxu0 0
        %1121 = vmatpush1.bf16.msra.mxu0 0
        %1122 = vmatprep.subr.bf16.mxu0 0
        %1123 = vmatpush1.bf16.msra.mxu0 0
        %1124 = vmatprep.subr.bf16.mxu0 0
        %1125 = vmatpush1.bf16.msra.mxu0 0
        %1126 = vmatprep.subr.bf16.mxu0 0
        %1127 = vmatpush1.bf16.msra.mxu0 0
        %1128 = vmatprep.subr.bf16.mxu0 0
        %1129 = vmatpush1.bf16.msra.mxu0 0
        %1130 = vmatprep.subr.bf16.mxu0 0
        %1131 = vmatpush1.bf16.msra.mxu0 0
        %1132 = vmatprep.subr.bf16.mxu0 0
        %1133 = vmatpush1.bf16.msra.mxu0 0
        %1134 = vmatprep.subr.bf16.mxu0 0
        %1135 = vmatpush1.bf16.msra.mxu0 0
        %1136 = vmatprep.subr.bf16.mxu0 0
        %1137 = vmatpush1.bf16.msra.mxu0 0
        %1138 = vmatprep.subr.bf16.mxu0 0
        %1139 = vmatpush1.bf16.msra.mxu0 0
        %1140 = vmatprep.subr.bf16.mxu0 0
        %1141 = vmatpush1.bf16.msra.mxu0 0
        %1142 = vmatprep.mubr.bf16.mxu0 0
        %1143 = vmatmul.mubr.bf16.gmra.mrb[0].mxu0 %v1105
        %v1144 = vpop.f32.mrb[0].mxu0
        %v1145 = vadd.f32 0.0, %v1144
        %v1146 = vpop.f32.mrb[0].mxu0
        %v1147 = vpop.f32.mrb[0].mxu0
        %v1148 = vpop.f32.mrb[0].mxu0
        %1149 = vdwg.mxu0
        %1150 = vrot.lane.b32.xlu0 %v539, 48
        %v1151 = vpop.permute.xlu0 %1150
        %v1153 = vsel %vm543, %v1101, 0
        %v1156 = vsel %vm666, %v1151, 0
        %1158 = vmatprep.subr.bf16.mxu0 0
        %1159 = vmatpush1.bf16.msra.mxu0 %v1156
        %1160 = vmatprep.subr.bf16.mxu0 0
        %1161 = vmatpush1.bf16.msra.mxu0 0
        %1162 = vmatprep.subr.bf16.mxu0 0
        %1163 = vmatpush1.bf16.msra.mxu0 0
        %1164 = vmatprep.subr.bf16.mxu0 0
        %1165 = vmatpush1.bf16.msra.mxu0 0
        %1166 = vmatprep.subr.bf16.mxu0 0
        %1167 = vmatpush1.bf16.msra.mxu0 0
        %1168 = vmatprep.subr.bf16.mxu0 0
        %1169 = vmatpush1.bf16.msra.mxu0 0
        %1170 = vmatprep.subr.bf16.mxu0 0
        %1171 = vmatpush1.bf16.msra.mxu0 0
        %1172 = vmatprep.subr.bf16.mxu0 0
        %1173 = vmatpush1.bf16.msra.mxu0 0
        %1174 = vmatprep.subr.bf16.mxu0 0
        %1175 = vmatpush1.bf16.msra.mxu0 0
        %1176 = vmatprep.subr.bf16.mxu0 0
        %1177 = vmatpush1.bf16.msra.mxu0 0
        %1178 = vmatprep.subr.bf16.mxu0 0
        %1179 = vmatpush1.bf16.msra.mxu0 0
        %1180 = vmatprep.subr.bf16.mxu0 0
        %1181 = vmatpush1.bf16.msra.mxu0 0
        %1182 = vmatprep.subr.bf16.mxu0 0
        %1183 = vmatpush1.bf16.msra.mxu0 0
        %1184 = vmatprep.subr.bf16.mxu0 0
        %1185 = vmatpush1.bf16.msra.mxu0 0
        %1186 = vmatprep.subr.bf16.mxu0 0
        %1187 = vmatpush1.bf16.msra.mxu0 0
        %1188 = vmatprep.subr.bf16.mxu0 0
        %1189 = vmatpush1.bf16.msra.mxu0 0
        %1190 = vmatprep.mubr.bf16.mxu0 0
        %1191 = vmatmul.mubr.bf16.gmra.mrb[0].mxu0 %v1153
        %v1192 = vpop.f32.mrb[0].mxu0
        %v1193 = vadd.f32 0.0, %v1192
        %v1194 = vpop.f32.mrb[0].mxu0
        %v1195 = vpop.f32.mrb[0].mxu0
        %v1196 = vpop.f32.mrb[0].mxu0
        %1197 = vdwg.mxu0
        %v1198 = vmul.f32 %v1145, %v1098
        %v1199 = vmul.f32 %v1193, %v1099
        %1200 = vrot.lane.b32.xlu0 %v538, 104
        %v1201 = vpop.permute.xlu0 %1200
        %1202 = vrot.lane.b32.xlu0 %v538, 72
        %v1203 = vpop.permute.xlu0 %1202
        %v1205 = vsel %vm543, %v1201, 0
        %v1208 = vsel %vm543, %v1203, 0
        %1210 = vmatprep.subr.bf16.mxu0 0
        %1211 = vmatpush1.bf16.xpose.msra.mxu0 %v1208
        %1212 = vmatprep.subr.bf16.mxu0 0
        %1213 = vmatpush1.bf16.xpose.msra.mxu0 0
        %1214 = vmatprep.subr.bf16.mxu0 0
        %1215 = vmatpush1.bf16.xpose.msra.mxu0 0
        %1216 = vmatprep.subr.bf16.mxu0 0
        %1217 = vmatpush1.bf16.xpose.msra.mxu0 0
        %1218 = vmatprep.subr.bf16.mxu0 0
        %1219 = vmatpush1.bf16.xpose.msra.mxu0 0
        %1220 = vmatprep.subr.bf16.mxu0 0
        %1221 = vmatpush1.bf16.xpose.msra.mxu0 0
        %1222 = vmatprep.subr.bf16.mxu0 0
        %1223 = vmatpush1.bf16.xpose.msra.mxu0 0
        %1224 = vmatprep.subr.bf16.mxu0 0
        %1225 = vmatpush1.bf16.xpose.msra.mxu0 0
        %1226 = vmatprep.subr.bf16.mxu0 0
        %1227 = vmatpush1.bf16.xpose.msra.mxu0 0
        %1228 = vmatprep.subr.bf16.mxu0 0
        %1229 = vmatpush1.bf16.xpose.msra.mxu0 0
        %1230 = vmatprep.subr.bf16.mxu0 0
        %1231 = vmatpush1.bf16.xpose.msra.mxu0 0
        %1232 = vmatprep.subr.bf16.mxu0 0
        %1233 = vmatpush1.bf16.xpose.msra.mxu0 0
        %1234 = vmatprep.subr.bf16.mxu0 0
        %1235 = vmatpush1.bf16.xpose.msra.mxu0 0
        %1236 = vmatprep.subr.bf16.mxu0 0
        %1237 = vmatpush1.bf16.xpose.msra.mxu0 0
        %1238 = vmatprep.subr.bf16.mxu0 0
        %1239 = vmatpush1.bf16.xpose.msra.mxu0 0
        %1240 = vmatprep.subr.bf16.mxu0 0
        %1241 = vmatpush1.bf16.xpose.msra.mxu0 0
        %1242 = vmatprep.mubr.bf16.mxu0 0
        %1243 = vmatmul.mubr.bf16.gmra.mrb[0].mxu0 %v1205
        %v1244 = vpop.f32.mrb[0].mxu0
        %v1245 = vadd.f32 0.0, %v1244
        %v1246 = vpop.f32.mrb[0].mxu0
        %v1247 = vpop.f32.mrb[0].mxu0
        %v1248 = vpop.f32.mrb[0].mxu0
        %1249 = vdwg.mxu0
        %1250 = vrot.lane.b32.xlu0 %v539, 104
        %v1251 = vpop.permute.xlu0 %1250
        %1252 = vrot.lane.b32.xlu0 %v539, 72
        %v1253 = vpop.permute.xlu0 %1252
        %v1255 = vsel %vm543, %v1251, 0
        %v1258 = vsel %vm543, %v1253, 0
        %1260 = vmatprep.subr.bf16.mxu0 0
        %1261 = vmatpush1.bf16.xpose.msra.mxu0 %v1258
        %1262 = vmatprep.subr.bf16.mxu0 0
        %1263 = vmatpush1.bf16.xpose.msra.mxu0 0
        %1264 = vmatprep.subr.bf16.mxu0 0
        %1265 = vmatpush1.bf16.xpose.msra.mxu0 0
        %1266 = vmatprep.subr.bf16.mxu0 0
        %1267 = vmatpush1.bf16.xpose.msra.mxu0 0
        %1268 = vmatprep.subr.bf16.mxu0 0
        %1269 = vmatpush1.bf16.xpose.msra.mxu0 0
        %1270 = vmatprep.subr.bf16.mxu0 0
        %1271 = vmatpush1.bf16.xpose.msra.mxu0 0
        %1272 = vmatprep.subr.bf16.mxu0 0
        %1273 = vmatpush1.bf16.xpose.msra.mxu0 0
        %1274 = vmatprep.subr.bf16.mxu0 0
        %1275 = vmatpush1.bf16.xpose.msra.mxu0 0
        %1276 = vmatprep.subr.bf16.mxu0 0
        %1277 = vmatpush1.bf16.xpose.msra.mxu0 0
        %1278 = vmatprep.subr.bf16.mxu0 0
        %1279 = vmatpush1.bf16.xpose.msra.mxu0 0
        %1280 = vmatprep.subr.bf16.mxu0 0
        %1281 = vmatpush1.bf16.xpose.msra.mxu0 0
        %1282 = vmatprep.subr.bf16.mxu0 0
        %1283 = vmatpush1.bf16.xpose.msra.mxu0 0
        %1284 = vmatprep.subr.bf16.mxu0 0
        %1285 = vmatpush1.bf16.xpose.msra.mxu0 0
        %1286 = vmatprep.subr.bf16.mxu0 0
        %1287 = vmatpush1.bf16.xpose.msra.mxu0 0
        %1288 = vmatprep.subr.bf16.mxu0 0
        %1289 = vmatpush1.bf16.xpose.msra.mxu0 0
        %1290 = vmatprep.subr.bf16.mxu0 0
        %1291 = vmatpush1.bf16.xpose.msra.mxu0 0
        %1292 = vmatprep.mubr.bf16.mxu0 0
        %1293 = vmatmul.mubr.bf16.gmra.mrb[0].mxu0 %v1255
        %v1294 = vpop.f32.mrb[0].mxu0
        %v1295 = vadd.f32 0.0, %v1294
        %v1296 = vpop.f32.mrb[0].mxu0
        %v1297 = vpop.f32.mrb[0].mxu0
        %v1298 = vpop.f32.mrb[0].mxu0
        %1299 = vdwg.mxu0
        %v1300 = vsel %vm543, %v1245, -inf
        %1301 = vmax.xlane.f32.xlu0 %v1300
        %v1302 = vpop.xlane.xlu0 %1301
        %v1303 = vsel %vm543, %v1295, -inf
        %1304 = vmax.xlane.f32.xlu0 %v1303
        %v1305 = vpop.xlane.xlu0 %1304
        %v1306 = vsub.f32 %v1245, %v1302
        %v1307 = vsub.f32 %v1295, %v1305
        %v1308 = vmul.f32 %v1306, 1.442695
        %v1309 = vpow.pop %v1308
        %v1310 = vmul.f32 %v1307, 1.442695
        %v1311 = vpow.pop %v1310
        %v1312 = vsel %vm543, %v1309, 0.0
        %1313 = vadd.xlane.f32.xlu0 %v1312
        %v1314 = vpop.xlane.xlu0 %1313
        %v1315 = vsel %vm543, %v1311, 0.0
        %1316 = vadd.xlane.f32.xlu0 %v1315
        %v1317 = vpop.xlane.xlu0 %1316
        %v1318 = vrcp.pop %v1314
        %v1319 = vrcp.pop %v1317
        %v1320 = vpack.c.bf16 %v1309, %v1309
        %v1321 = vpack.c.bf16 %v1311, %v1311
        %1322 = vrot.lane.b32.xlu0 %v538, 40
        %v1323 = vpop.permute.xlu0 %1322
        %v1325 = vsel %vm543, %v1320, 0
        %v1328 = vsel %vm666, %v1323, 0
        %1330 = vmatprep.subr.bf16.mxu0 0
        %1331 = vmatpush1.bf16.msra.mxu0 %v1328
        %1332 = vmatprep.subr.bf16.mxu0 0
        %1333 = vmatpush1.bf16.msra.mxu0 0
        %1334 = vmatprep.subr.bf16.mxu0 0
        %1335 = vmatpush1.bf16.msra.mxu0 0
        %1336 = vmatprep.subr.bf16.mxu0 0
        %1337 = vmatpush1.bf16.msra.mxu0 0
        %1338 = vmatprep.subr.bf16.mxu0 0
        %1339 = vmatpush1.bf16.msra.mxu0 0
        %1340 = vmatprep.subr.bf16.mxu0 0
        %1341 = vmatpush1.bf16.msra.mxu0 0
        %1342 = vmatprep.subr.bf16.mxu0 0
        %1343 = vmatpush1.bf16.msra.mxu0 0
        %1344 = vmatprep.subr.bf16.mxu0 0
        %1345 = vmatpush1.bf16.msra.mxu0 0
        %1346 = vmatprep.subr.bf16.mxu0 0
        %1347 = vmatpush1.bf16.msra.mxu0 0
        %1348 = vmatprep.subr.bf16.mxu0 0
        %1349 = vmatpush1.bf16.msra.mxu0 0
        %1350 = vmatprep.subr.bf16.mxu0 0
        %1351 = vmatpush1.bf16.msra.mxu0 0
        %1352 = vmatprep.subr.bf16.mxu0 0
        %1353 = vmatpush1.bf16.msra.mxu0 0
        %1354 = vmatprep.subr.bf16.mxu0 0
        %1355 = vmatpush1.bf16.msra.mxu0 0
        %1356 = vmatprep.subr.bf16.mxu0 0
        %1357 = vmatpush1.bf16.msra.mxu0 0
        %1358 = vmatprep.subr.bf16.mxu0 0
        %1359 = vmatpush1.bf16.msra.mxu0 0
        %1360 = vmatprep.subr.bf16.mxu0 0
        %1361 = vmatpush1.bf16.msra.mxu0 0
        %1362 = vmatprep.mubr.bf16.mxu0 0
        %1363 = vmatmul.mubr.bf16.gmra.mrb[0].mxu0 %v1325
        %v1364 = vpop.f32.mrb[0].mxu0
        %v1365 = vadd.f32 0.0, %v1364
        %v1366 = vpop.f32.mrb[0].mxu0
        %v1367 = vpop.f32.mrb[0].mxu0
        %v1368 = vpop.f32.mrb[0].mxu0
        %1369 = vdwg.mxu0
        %1370 = vrot.lane.b32.xlu0 %v539, 40
        %v1371 = vpop.permute.xlu0 %1370
        %v1373 = vsel %vm543, %v1321, 0
        %v1376 = vsel %vm666, %v1371, 0
        %1378 = vmatprep.subr.bf16.mxu0 0
        %1379 = vmatpush1.bf16.msra.mxu0 %v1376
        %1380 = vmatprep.subr.bf16.mxu0 0
        %1381 = vmatpush1.bf16.msra.mxu0 0
        %1382 = vmatprep.subr.bf16.mxu0 0
        %1383 = vmatpush1.bf16.msra.mxu0 0
        %1384 = vmatprep.subr.bf16.mxu0 0
        %1385 = vmatpush1.bf16.msra.mxu0 0
        %1386 = vmatprep.subr.bf16.mxu0 0
        %1387 = vmatpush1.bf16.msra.mxu0 0
        %1388 = vmatprep.subr.bf16.mxu0 0
        %1389 = vmatpush1.bf16.msra.mxu0 0
        %1390 = vmatprep.subr.bf16.mxu0 0
        %1391 = vmatpush1.bf16.msra.mxu0 0
        %1392 = vmatprep.subr.bf16.mxu0 0
        %1393 = vmatpush1.bf16.msra.mxu0 0
        %1394 = vmatprep.subr.bf16.mxu0 0
        %1395 = vmatpush1.bf16.msra.mxu0 0
        %1396 = vmatprep.subr.bf16.mxu0 0
        %1397 = vmatpush1.bf16.msra.mxu0 0
        %1398 = vmatprep.subr.bf16.mxu0 0
        %1399 = vmatpush1.bf16.msra.mxu0 0
        %1400 = vmatprep.subr.bf16.mxu0 0
        %1401 = vmatpush1.bf16.msra.mxu0 0
        %1402 = vmatprep.subr.bf16.mxu0 0
        %1403 = vmatpush1.bf16.msra.mxu0 0
        %1404 = vmatprep.subr.bf16.mxu0 0
        %1405 = vmatpush1.bf16.msra.mxu0 0
        %1406 = vmatprep.subr.bf16.mxu0 0
        %1407 = vmatpush1.bf16.msra.mxu0 0
        %1408 = vmatprep.subr.bf16.mxu0 0
        %1409 = vmatpush1.bf16.msra.mxu0 0
        %1410 = vmatprep.mubr.bf16.mxu0 0
        %1411 = vmatmul.mubr.bf16.gmra.mrb[0].mxu0 %v1373
        %v1412 = vpop.f32.mrb[0].mxu0
        %v1413 = vadd.f32 0.0, %v1412
        %v1414 = vpop.f32.mrb[0].mxu0
        %v1415 = vpop.f32.mrb[0].mxu0
        %v1416 = vpop.f32.mrb[0].mxu0
        %1417 = vdwg.mxu0
        %v1418 = vmul.f32 %v1365, %v1318
        %v1419 = vmul.f32 %v1413, %v1319
        %1422 = vrot.lane.b32.xlu0 %v978, 8
        %v1423 = vpop.permute.xlu0 %1422
        %1424 = vrot.lane.b32.xlu0 %v979, 8
        %v1425 = vpop.permute.xlu0 %1424
        %1430 = vrot.lane.b32.xlu0 %v1198, 16
        %v1431 = vpop.permute.xlu0 %1430
        %1432 = vrot.lane.b32.xlu0 %v1199, 16
        %v1433 = vpop.permute.xlu0 %1432
        %1438 = vrot.lane.b32.xlu0 %v1418, 24
        %v1439 = vpop.permute.xlu0 %1438
        %1440 = vrot.lane.b32.xlu0 %v1419, 24
        %v1441 = vpop.permute.xlu0 %1440
        %v1444 = vsel %vm543, %v758, %v1423
        %v1445 = vsel %vm543, %v759, %v1425
        %vm1446 = vcmask 130048
        %v1447 = vsel %vm1446, %v1444, %v1431
        %v1448 = vsel %vm1446, %v1445, %v1433
        %vm1449 = vcmask 195584
        %v1450 = vsel %vm1449, %v1447, %v1439
        %v1451 = vsel %vm1449, %v1448, %v1441
        %v1452 = vld [vmem:[%s455] sm:$0x1]
        %v1453 = vld [vmem:[%s455 + $0x1] sm:$0x1]
        %v1454 = vld [vmem:[%s455 + $0x2] sm:$0x1]
        %v1455 = vld [vmem:[%s455 + $0x3] sm:$0x1]
        %v1456 = vld [vmem:[%s455 + $0x4] sm:$0x1]
        %v1457 = vld [vmem:[%s455 + $0x5] sm:$0x1]
        %v1458 = vpack.c.bf16 %v1451, %v1450
        %v1459 = vld [vmem:[%s441] sm:$0xf]
        %v1460 = vld [vmem:[%s441 + $0x4] sm:$0xf]
        %v1461 = vld [vmem:[%s441 + $0x8] sm:$0xf]
        %v1462 = vld [vmem:[%s441 + $0xc] sm:$0xf]
        %v1463 = vlaneseq
        %v1464 = vshrl.u32 %v1463, 7
        %v1465 = vsub.s32 0, %v1464
        %v1466 = vrot.slane %v1452, %v1465
        %v1471 = vunpack.c.l.b16 %v1459
        %v1472 = vunpack.c.l.b16 %v1460
        %v1473 = vunpack.c.l.b16 %v1461
        %v1474 = vunpack.c.l.b16 %v1462
        %v1475 = vpack.c.b16 %v1472, %v1471
        %v1476 = vpack.c.b16 %v1474, %v1473
        %v1480 = vsel %vm493, %v1458, 0
        %1482 = vmatprep.subr.bf16.mxu0 0
        %1483 = vmatpush1.bf16.msra.mxu0 %v1475
        %1484 = vmatprep.subr.bf16.mxu0 0
        %1485 = vmatpush1.bf16.msra.mxu0 %v1476
        %1486 = vmatprep.subr.bf16.mxu0 0
        %1487 = vmatpush1.bf16.msra.mxu0 0
        %1488 = vmatprep.subr.bf16.mxu0 0
        %1489 = vmatpush1.bf16.msra.mxu0 0
        %1490 = vmatprep.subr.bf16.mxu0 0
        %1491 = vmatpush1.bf16.msra.mxu0 0
        %1492 = vmatprep.subr.bf16.mxu0 0
        %1493 = vmatpush1.bf16.msra.mxu0 0
        %1494 = vmatprep.subr.bf16.mxu0 0
        %1495 = vmatpush1.bf16.msra.mxu0 0
        %1496 = vmatprep.subr.bf16.mxu0 0
        %1497 = vmatpush1.bf16.msra.mxu0 0
        %1498 = vmatprep.subr.bf16.mxu0 0
        %1499 = vmatpush1.bf16.msra.mxu0 0
        %1500 = vmatprep.subr.bf16.mxu0 0
        %1501 = vmatpush1.bf16.msra.mxu0 0
        %1502 = vmatprep.subr.bf16.mxu0 0
        %1503 = vmatpush1.bf16.msra.mxu0 0
        %1504 = vmatprep.subr.bf16.mxu0 0
        %1505 = vmatpush1.bf16.msra.mxu0 0
        %1506 = vmatprep.subr.bf16.mxu0 0
        %1507 = vmatpush1.bf16.msra.mxu0 0
        %1508 = vmatprep.subr.bf16.mxu0 0
        %1509 = vmatpush1.bf16.msra.mxu0 0
        %1510 = vmatprep.subr.bf16.mxu0 0
        %1511 = vmatpush1.bf16.msra.mxu0 0
        %1512 = vmatprep.subr.bf16.mxu0 0
        %1513 = vmatpush1.bf16.msra.mxu0 0
        %1514 = vmatprep.mubr.bf16.mxu0 0
        %1515 = vmatmul.mubr.bf16.gmra.mrb[0].mxu0 %v1480
        %v1516 = vpop.f32.mrb[0].mxu0
        %v1517 = vadd.f32 %v1466, %v1516
        %v1518 = vpop.f32.mrb[0].mxu0
        %v1519 = vpop.f32.mrb[0].mxu0
        %v1520 = vadd.f32 %v1466, %v1519
        %v1521 = vpop.f32.mrb[0].mxu0
        %1522 = vdwg.mxu0
        %v1523 = vadd.f32 %v467, %v1517
        %v1524 = vadd.f32 %v468, %v1520
        %v1525 = vsel %vm493, %v1523, 0.0
        %1526 = vadd.xlane.f32.xlu0 %v1525
        %v1527 = vpop.xlane.xlu0 %1526
        %v1528 = vsel %vm493, %v1524, 0.0
        %1529 = vadd.xlane.f32.xlu0 %v1528
        %v1530 = vpop.xlane.xlu0 %1529
        %v1531 = vrcp.pop 32.0
        %v1532 = vmul.f32 %v1527, %v1531
        %v1533 = vmul.f32 %v1530, %v1531
        %v1534 = vsub.f32 %v1523, %v1532
        %v1535 = vsub.f32 %v1524, %v1533
        %v1536 = vmul.f32 %v1534, %v1534
        %v1537 = vmul.f32 %v1535, %v1535
        %v1538 = vsel %vm493, %v1536, 0.0
        %1539 = vadd.xlane.f32.xlu0 %v1538
        %v1540 = vpop.xlane.xlu0 %1539
        %v1541 = vsel %vm493, %v1537, 0.0
        %1542 = vadd.xlane.f32.xlu0 %v1541
        %v1543 = vpop.xlane.xlu0 %1542
        %v1544 = vmul.f32 %v1540, %v1531
        %v1545 = vmul.f32 %v1543, %v1531
        %v1546 = vadd.f32 %v1544, 1e-05
        %v1547 = vadd.f32 %v1545, 1e-05
        %v1548 = vrsqrt.pop %v1546
        %v1549 = vrsqrt.pop %v1547
        %v1550 = vmul.f32 %v1534, %v1548
        %v1551 = vmul.f32 %v1535, %v1549
        %v1552 = vlaneseq
        %v1553 = vshrl.u32 %v1552, 7
        %v1554 = vsub.s32 0, %v1553
        %v1555 = vrot.slane %v1453, %v1554
        %v1556 = vmul.f32 %v1550, %v1555
        %v1557 = vmul.f32 %v1551, %v1555
        %v1558 = vlaneseq
        %v1559 = vshrl.u32 %v1558, 7
        %v1560 = vsub.s32 0, %v1559
        %v1561 = vrot.slane %v1454, %v1560
        %v1562 = vadd.f32 %v1556, %v1561
        %v1563 = vadd.f32 %v1557, %v1561
        %v1564 = vpack.c.bf16 %v1563, %v1562
        %v1565 = vld [vmem:[%s446] sm:$0xf]
        %v1566 = vld [vmem:[%s446 + $0x4] sm:$0xf]
        %v1567 = vld [vmem:[%s446 + $0x8] sm:$0xf]
        %v1568 = vld [vmem:[%s446 + $0xc] sm:$0xf]
        %v1569 = vld [vmem:[%s364] sm:$0x1]
        %v1571 = vlaneseq
        %v1572 = vshrl.u32 %v1571, 7
        %v1573 = vsub.s32 0, %v1572
        %v1574 = vrot.slane %v1569, %v1573
        %v1580 = vunpack.c.l.b16 %v1565
        %v1581 = vunpack.c.l.b16 %v1566
        %v1582 = vunpack.c.l.b16 %v1567
        %v1583 = vunpack.c.l.b16 %v1568
        %v1584 = vpack.c.b16 %v1581, %v1580
        %v1585 = vpack.c.b16 %v1583, %v1582
        %v1589 = vsel %vm493, %v1564, 0
        %1591 = vmatprep.subr.bf16.mxu0 0
        %1592 = vmatpush1.bf16.msra.mxu0 %v1584
        %1593 = vmatprep.subr.bf16.mxu0 0
        %1594 = vmatpush1.bf16.msra.mxu0 %v1585
        %1595 = vmatprep.subr.bf16.mxu0 0
        %1596 = vmatpush1.bf16.msra.mxu0 0
        %1597 = vmatprep.subr.bf16.mxu0 0
        %1598 = vmatpush1.bf16.msra.mxu0 0
        %1599 = vmatprep.subr.bf16.mxu0 0
        %1600 = vmatpush1.bf16.msra.mxu0 0
        %1601 = vmatprep.subr.bf16.mxu0 0
        %1602 = vmatpush1.bf16.msra.mxu0 0
        %1603 = vmatprep.subr.bf16.mxu0 0
        %1604 = vmatpush1.bf16.msra.mxu0 0
        %1605 = vmatprep.subr.bf16.mxu0 0
        %1606 = vmatpush1.bf16.msra.mxu0 0
        %1607 = vmatprep.subr.bf16.mxu0 0
        %1608 = vmatpush1.bf16.msra.mxu0 0
        %1609 = vmatprep.subr.bf16.mxu0 0
        %1610 = vmatpush1.bf16.msra.mxu0 0
        %1611 = vmatprep.subr.bf16.mxu0 0
        %1612 = vmatpush1.bf16.msra.mxu0 0
        %1613 = vmatprep.subr.bf16.mxu0 0
        %1614 = vmatpush1.bf16.msra.mxu0 0
        %1615 = vmatprep.subr.bf16.mxu0 0
        %1616 = vmatpush1.bf16.msra.mxu0 0
        %1617 = vmatprep.subr.bf16.mxu0 0
        %1618 = vmatpush1.bf16.msra.mxu0 0
        %1619 = vmatprep.subr.bf16.mxu0 0
        %1620 = vmatpush1.bf16.msra.mxu0 0
        %1621 = vmatprep.subr.bf16.mxu0 0
        %1622 = vmatpush1.bf16.msra.mxu0 0
        %1623 = vmatprep.mubr.bf16.mxu0 0
        %1624 = vmatmul.mubr.bf16.gmra.mrb[0].mxu0 %v1589
        %v1625 = vpop.f32.mrb[0].mxu0
        %v1626 = vadd.f32 %v1574, %v1625
        %v1627 = vpop.f32.mrb[0].mxu0
        %v1628 = vpop.f32.mrb[0].mxu0
        %v1629 = vadd.f32 %v1574, %v1628
        %v1630 = vpop.f32.mrb[0].mxu0
        %1631 = vdwg.mxu0
        %v1632 = vmax.f32 %v1626, 0.0
        %v1633 = vmax.f32 %v1629, 0.0
        %v1634 = vpack.c.bf16 %v1633, %v1632
        %v1635 = vld [vmem:[%s451] sm:$0xf]
        %v1636 = vld [vmem:[%s451 + $0x4] sm:$0xf]
        %v1637 = vld [vmem:[%s451 + $0x8] sm:$0xf]
        %v1638 = vld [vmem:[%s451 + $0xc] sm:$0xf]
        %v1639 = vld [vmem:[%s451 + $0x10] sm:$0xf]
        %v1640 = vld [vmem:[%s451 + $0x14] sm:$0xf]
        %v1641 = vld [vmem:[%s451 + $0x18] sm:$0xf]
        %v1642 = vld [vmem:[%s451 + $0x1c] sm:$0xf]
        %v1643 = vlaneseq
        %v1644 = vshrl.u32 %v1643, 7
        %v1645 = vsub.s32 0, %v1644
        %v1646 = vrot.slane %v1455, %v1645
        %v1655 = vunpack.c.l.b16 %v1635
        %v1656 = vunpack.c.l.b16 %v1636
        %v1657 = vunpack.c.l.b16 %v1637
        %v1658 = vunpack.c.l.b16 %v1638
        %v1659 = vunpack.c.l.b16 %v1639
        %v1660 = vunpack.c.l.b16 %v1640
        %v1661 = vunpack.c.l.b16 %v1641
        %v1662 = vunpack.c.l.b16 %v1642
        %v1663 = vpack.c.b16 %v1656, %v1655
        %v1664 = vpack.c.b16 %v1658, %v1657
        %v1665 = vpack.c.b16 %v1660, %v1659
        %v1666 = vpack.c.b16 %v1662, %v1661
        %vm1671 = vcmask 523264
        %v1673 = vsel %vm1671, %v1634, 0
        %1675 = vmatprep.subr.bf16.mxu0 0
        %1676 = vmatpush1.bf16.msra.mxu0 %v1663
        %1677 = vmatprep.subr.bf16.mxu0 0
        %1678 = vmatpush1.bf16.msra.mxu0 %v1664
        %1679 = vmatprep.subr.bf16.mxu0 0
        %1680 = vmatpush1.bf16.msra.mxu0 %v1665
        %1681 = vmatprep.subr.bf16.mxu0 0
        %1682 = vmatpush1.bf16.msra.mxu0 %v1666
        %1683 = vmatprep.subr.bf16.mxu0 0
        %1684 = vmatpush1.bf16.msra.mxu0 0
        %1685 = vmatprep.subr.bf16.mxu0 0
        %1686 = vmatpush1.bf16.msra.mxu0 0
        %1687 = vmatprep.subr.bf16.mxu0 0
        %1688 = vmatpush1.bf16.msra.mxu0 0
        %1689 = vmatprep.subr.bf16.mxu0 0
        %1690 = vmatpush1.bf16.msra.mxu0 0
        %1691 = vmatprep.subr.bf16.mxu0 0
        %1692 = vmatpush1.bf16.msra.mxu0 0
        %1693 = vmatprep.subr.bf16.mxu0 0
        %1694 = vmatpush1.bf16.msra.mxu0 0
        %1695 = vmatprep.subr.bf16.mxu0 0
        %1696 = vmatpush1.bf16.msra.mxu0 0
        %1697 = vmatprep.subr.bf16.mxu0 0
        %1698 = vmatpush1.bf16.msra.mxu0 0
        %1699 = vmatprep.subr.bf16.mxu0 0
        %1700 = vmatpush1.bf16.msra.mxu0 0
        %1701 = vmatprep.subr.bf16.mxu0 0
        %1702 = vmatpush1.bf16.msra.mxu0 0
        %1703 = vmatprep.subr.bf16.mxu0 0
        %1704 = vmatpush1.bf16.msra.mxu0 0
        %1705 = vmatprep.subr.bf16.mxu0 0
        %1706 = vmatpush1.bf16.msra.mxu0 0
        %1707 = vmatprep.mubr.bf16.mxu0 0
        %1708 = vmatmul.mubr.bf16.gmra.mrb[0].mxu0 %v1673
        %v1709 = vpop.f32.mrb[0].mxu0
        %v1710 = vadd.f32 %v1646, %v1709
        %v1711 = vpop.f32.mrb[0].mxu0
        %v1712 = vpop.f32.mrb[0].mxu0
        %v1713 = vadd.f32 %v1646, %v1712
        %v1714 = vpop.f32.mrb[0].mxu0
        %1715 = vdwg.mxu0
        %v1716 = vadd.f32 %v1562, %v1710
        %v1717 = vadd.f32 %v1563, %v1713
        %v1718 = vsel %vm493, %v1716, 0.0
        %1719 = vadd.xlane.f32.xlu0 %v1718
        %v1720 = vpop.xlane.xlu0 %1719
        %v1721 = vsel %vm493, %v1717, 0.0
        %1722 = vadd.xlane.f32.xlu0 %v1721
        %v1723 = vpop.xlane.xlu0 %1722
        %v1724 = vmul.f32 %v1720, %v1531
        %v1725 = vmul.f32 %v1723, %v1531
        %v1726 = vsub.f32 %v1716, %v1724
        %v1727 = vsub.f32 %v1717, %v1725
        %v1728 = vmul.f32 %v1726, %v1726
        %v1729 = vmul.f32 %v1727, %v1727
        %v1730 = vsel %vm493, %v1728, 0.0
        %1731 = vadd.xlane.f32.xlu0 %v1730
        %v1732 = vpop.xlane.xlu0 %1731
        %v1733 = vsel %vm493, %v1729, 0.0
        %1734 = vadd.xlane.f32.xlu0 %v1733
        %v1735 = vpop.xlane.xlu0 %1734
        %v1736 = vmul.f32 %v1732, %v1531
        %v1737 = vmul.f32 %v1735, %v1531
        %v1738 = vadd.f32 %v1736, 1e-05
        %v1739 = vadd.f32 %v1737, 1e-05
        %v1740 = vrsqrt.pop %v1738
        %v1741 = vrsqrt.pop %v1739
        %v1742 = vmul.f32 %v1726, %v1740
        %v1743 = vmul.f32 %v1727, %v1741
        %v1744 = vlaneseq
        %v1745 = vshrl.u32 %v1744, 7
        %v1746 = vsub.s32 0, %v1745
        %v1747 = vrot.slane %v1456, %v1746
        %v1748 = vmul.f32 %v1742, %v1747
        %v1749 = vmul.f32 %v1743, %v1747
        %v1750 = vlaneseq
        %v1751 = vshrl.u32 %v1750, 7
        %v1752 = vsub.s32 0, %v1751
        %v1753 = vrot.slane %v1457, %v1752
        %v1754 = vadd.f32 %v1748, %v1753
        %v1755 = vadd.f32 %v1749, %v1753
        %1756 = vst.msk [vmem:[#allocation5] sm:$0xff] %vm493, %v1754
        %1757 = vst.msk [vmem:[#allocation5 + $0x8] sm:$0xff] %vm493, %v1755
        // Predicated region
        $region61: #{tpu_custom_call.1} parent=51 // pred_check
          %p1758 = pneg %p261
        $region62: #{tpu_custom_call.1} parent=51 // pred_check_branch
          %1760 = sbr.rel (%p1758) target = $region64
        $region63: #{tpu_custom_call.1} parent=51 // pred_region
          %s1761 = smul.u32 2, %s27
          %s1763 = ssub.s32 256, 256
          %1764 = vsyncadd [#allocation4], %s1763
          %s1765 = smul.addr %s1761, 128
          %s1766 = scalar_lea.hbm %s8, %s1765
          %s1767 = sshll.u32 [#allocation5], 4
          %s1768 = int_to_ptr.vmem [resolvable:$true] %s1767
          %1773 = dma.vmem_to_hbm [thread:$0]  %s1768, 256, %s1766, [#allocation4], 128, 128, 8
        $region64: #{tpu_custom_call.1} parent=51 // pred_fallthru
          _
        // Predicated region
        $region65: #{tpu_custom_call.1} parent=51 // pred_check
          %p1774 = pneg %p261
        $region66: #{tpu_custom_call.1} parent=51 // pred_check_branch
          %1776 = sbr.rel (%p1774) target = $region68
        $region67: #{tpu_custom_call.1} parent=51 // pred_region
          %1777 = dma.done [#allocation4], 256
        $region68: #{tpu_custom_call.1} parent=51 // pred_fallthru
          _
      $region52: #{tpu_custom_call.1} parent=5 // pred_fallthru
        _
      %p1778 = scmp.le.s32.totalorder 2, %s18
      // Predicated region
      $region69: #{tpu_custom_call.1} parent=5 // pred_check
        %p1779 = pneg %p1778
      $region70: #{tpu_custom_call.1} parent=5 // pred_check_branch
        %1781 = sbr.rel (%p1779) target = $region72
      $region71: #{tpu_custom_call.1} parent=5 // pred_region
        %s1782 = ssub.s32 %s18, 2
      $region72: #{tpu_custom_call.1} parent=5 // pred_fallthru
        _
    $region6: #{tpu_custom_call.1} parent=1 // loop_footer
      %s22 = sadd.s32 1, %s18
    $region7: #{tpu_custom_call.1} parent=1 // loop_footer_branch
      %17 = sbr.rel target = $region3
    $region8: #{tpu_custom_call.1} parent=1 // loop_exit
      _
    %1783 = vsyncpa [#allocation3], 1
    %s1784 = scalar_lea.sflag [#allocation3], 1
    %1785 = vsyncpa %s1784, 1
    %1786 = vsyncpa [#allocation4], 1
    %s1787 = scalar_lea.sflag [#allocation4], 1
    %1788 = vsyncpa %s1787, 1

</llo_original>
